<compile_context>
chip_gen: v6e
topology: v6e:2x2x1
jax: 0.10.0
libtpu: 0.0.40
codegen_flags: <defaults>
</compile_context>

<pallas_src>
import jax
import jax.numpy as jnp
import numpy as np
from jax import lax
from jax.experimental import pallas as pl
from jax.experimental.pallas import tpu as pltpu


def _round_up(x, m):
    return (x + m - 1) // m * m


# --------------------------------------------------------------------------
# Kernel 1: conv1 as an MXU matmul over bf16 im2col patches (f32 accumulate).
# No carried state -> the grid axis is fully parallel (megacore-friendly).
# --------------------------------------------------------------------------
def _conv1_matmul_kernel(a_ref, w_ref, z_ref):
    z_ref[...] = jnp.dot(a_ref[...], w_ref[...],
                         preferred_element_type=jnp.float32)


# --------------------------------------------------------------------------
# Kernel 2: BatchNorm affine + PReLU + 1x1x1 conv + 2-way softmax on a
# lane-dense, channel-interleaved view.
#   zi_ref  : (tr, 128) f32; lane 2k   = channel 0 of voxel 64*i + k
#                            lane 2k+1 = channel 1 of voxel 64*i + k
#   par_ref : (4, 128) f32 rows = [bn_scale, bn_shift, prelu_alpha, bias_diff]
#   wmix_ref: (128,128) f32 block-diagonal; y @ wmix yields, per lane pair,
#             +/- (u0 - u1) of the 1x1x1-conv logits (bias folded into biasd).
# 2-way softmax == sigmoid of the pairwise logit difference.
# --------------------------------------------------------------------------
def _bn_prelu_mix_softmax_kernel(zi_ref, par_ref, wmix_ref, o_ref):
    z = zi_ref[...]
    scale = par_ref[0:1, :]
    shift = par_ref[1:2, :]
    alpha = par_ref[2:3, :]
    biasd = par_ref[3:4, :]
    y = z * scale + shift                        # BatchNorm (train-mode stats)
    y = jnp.where(y > 0, y, alpha * y)           # PReLU, per-channel slope
    d = jnp.dot(y, wmix_ref[...],
                preferred_element_type=jnp.float32) + biasd
    o_ref[...] = 1.0 / (1.0 + jnp.exp(-d))       # softmax over the channel pair


# --------------------------------------------------------------------------
# Wrapper
# --------------------------------------------------------------------------
def output_forward(x, w1, gamma, beta, prelu_a, w2_io, b2, *,
                   eps=1e-5, tm=1024, tr2_max=1024):
    """x: (N, C, D, H, W) f32 (NCDHW, like PyTorch).  Returns (N*D*H*W, 2)."""
    N, C, D, H, W = x.shape
    K, pad = 5, 2
    M = N * D * H * W
    Kdim = K * K * K * C
    Kp = _round_up(Kdim, 128)

    assert tm % 256 == 0
    tm = min(tm, _round_up(M, 256))
    Mp = _round_up(M, tm)

    # ---- im2col glue (plain JAX), materialized directly in bf16 and with the
    #      K-dim zero pad folded into the single concatenate (no extra copy).
    #      bf16 halves the HBM bytes of the dominant stream feeding kernel 1;
    #      the MXU accumulates in f32.
    xb = jnp.transpose(x, (0, 2, 3, 4, 1)).astype(jnp.bfloat16)   # NDHWC
    xp = jnp.pad(xb, ((0, 0), (pad, pad), (pad, pad), (pad, pad), (0, 0)))
    slices = [xp[:, kd:kd + D, kh:kh + H, kw:kw + W, :]
              for kd in range(K) for kh in range(K) for kw in range(K)]
    if Kp > Kdim:                                  # zero columns are inert
        slices.append(jnp.zeros((N, D, H, W, Kp - Kdim), jnp.bfloat16))
    A = jnp.concatenate(slices, axis=-1).reshape(M, Kp)
    if Mp > M:                                     # zero rows are inert
        A = jnp.pad(A, ((0, Mp - M), (0, 0)))

    # conv1 weight (O, C, kd, kh, kw) flattened to match the patch ordering.
    W1 = jnp.transpose(w1.astype(jnp.float32), (2, 3, 4, 1, 0)).reshape(Kdim, 2)
    W1 = jnp.pad(W1, ((0, Kp - Kdim), (0, 0))).astype(jnp.bfloat16)

    # ---- kernel 1: z = A @ W1, 1024-row tiles, fully parallel grid.
    z = pl.pallas_call(
        _conv1_matmul_kernel,
        out_shape=jax.ShapeDtypeStruct((Mp, 2), jnp.float32),
        grid=(Mp // tm,),
        in_specs=[pl.BlockSpec((tm, Kp), lambda i: (i, 0)),
                  pl.BlockSpec((Kp, 2), lambda i: (0, 0))],
        out_specs=pl.BlockSpec((tm, 2), lambda i: (i, 0)),
        compiler_params=pltpu.CompilerParams(
            dimension_semantics=("parallel",)),
    )(A, W1)

    # ---- BatchNorm train-mode statistics (batch mean, biased variance),
    # reduced in glue from the tiny 2-channel output: keeps kernel 1 free of
    # cross-step accumulators and uses a cancellation-free two-pass variance.
    zv = z[:M]
    mean = jnp.mean(zv, axis=0)                       # (2,)
    var = jnp.mean(jnp.square(zv - mean), axis=0)     # biased (train mode)
    scale = gamma.astype(jnp.float32) / jnp.sqrt(var + eps)
    shift = beta.astype(jnp.float32) - mean * scale

    # ---- fold conv2 (1x1x1 + bias) and the 2-way softmax into a pairwise
    # logit difference:  softmax([u0,u1])[0] = sigmoid(u0 - u1), with
    #   u0 - u1 = (w00-w01)*y0 + (w10-w11)*y1 + (b0-b1).
    w2 = w2_io.astype(jnp.float32)                    # [in, out]
    b2f = b2.astype(jnp.float32)
    a_coef = w2[0, 0] - w2[0, 1]
    c_coef = w2[1, 0] - w2[1, 1]
    pair_blk = jnp.stack([jnp.stack([a_coef, -a_coef]),
                          jnp.stack([c_coef, -c_coef])])          # (2, 2)
    wmix = jnp.kron(jnp.eye(64, dtype=jnp.float32), pair_blk)     # (128, 128)
    biasd = jnp.tile(jnp.stack([b2f[0] - b2f[1], b2f[1] - b2f[0]]), 64)

    params_l = jnp.stack([jnp.tile(scale, 64),
                          jnp.tile(shift, 64),
                          jnp.tile(prelu_a.astype(jnp.float32), 64),
                          biasd], axis=0)             # (4, 128)

    # ---- kernel 2 on the lane-dense channel-interleaved view of z.
    rows_i = Mp // 64
    tr2 = min(tr2_max, rows_i)
    rows_p = _round_up(rows_i, tr2)
    z_i = z.reshape(rows_i, 128)                      # free row-major reinterpretation
    if rows_p != rows_i:
        z_i = jnp.pad(z_i, ((0, rows_p - rows_i), (0, 0)))

    out_i = pl.pallas_call(
        _bn_prelu_mix_softmax_kernel,
        out_shape=jax.ShapeDtypeStruct((rows_p, 128), jnp.float32),
        grid=(rows_p // tr2,),
        in_specs=[pl.BlockSpec((tr2, 128), lambda i: (i, 0)),
                  pl.BlockSpec((4, 128), lambda i: (0, 0)),
                  pl.BlockSpec((128, 128), lambda i: (0, 0))],
        out_specs=pl.BlockSpec((tr2, 128), lambda i: (i, 0)),
        compiler_params=pltpu.CompilerParams(
            dimension_semantics=("parallel",)),
    )(z_i, params_l, wmix)

    return out_i[:rows_i].reshape(Mp, 2)[:M]


# --------------------------------------------------------------------------
# Pure-JAX reference (mirrors the PyTorch module, training-mode BN)
# --------------------------------------------------------------------------
def reference_forward(x, w1, gamma, beta, prelu_a, w2_io, b2, eps=1e-5):
    z = lax.conv_general_dilated(
        x.astype(jnp.float32), w1.astype(jnp.float32),
        window_strides=(1, 1, 1),
        padding=[(2, 2)] * 3,
        dimension_numbers=('NCDHW', 'OIDHW', 'NCDHW'),
        precision=lax.Precision.HIGHEST)
    mean = jnp.mean(z, axis=(0, 2, 3, 4), keepdims=True)
    var = jnp.mean((z - mean) ** 2, axis=(0, 2, 3, 4), keepdims=True)
    y = (z - mean) / jnp.sqrt(var + eps) * gamma.reshape(1, 2, 1, 1, 1) \
        + beta.reshape(1, 2, 1, 1, 1)
    a = prelu_a.reshape(1, 2, 1, 1, 1)
    y = jnp.where(y > 0, y, a * y)
    y2 = jnp.einsum('io,nidhw->nodhw', w2_io, y,
                    precision=lax.Precision.HIGHEST) \
        + b2.reshape(1, 2, 1, 1, 1)
    y2 = jnp.transpose(y2, (0, 2, 3, 4, 1)).reshape(-1, 2)
    return jax.nn.softmax(y2, axis=1)


if __name__ == "__main__":
    key = jax.random.PRNGKey(0)
    k1, k2, k3, k4 = jax.random.split(key, 4)

    # Small shapes consistent with the module: NCDHW 3-D conv input.
    N, C, D, H, W = 2, 4, 8, 8, 8
    x = jax.random.normal(k1, (N, C, D, H, W), jnp.float32)

    # Deterministic parameter init (synthetic; shapes follow __init__).
    w1 = jax.random.normal(k2, (2, C, 5, 5, 5), jnp.float32) * 0.05  # conv1 weight
    gamma = jnp.array([1.0, 1.2], jnp.float32)                        # bn1 weight
    beta = jnp.array([0.05, -0.05], jnp.float32)                      # bn1 bias
    prelu_a = jnp.array([0.25, 0.1], jnp.float32)                     # PReLU(2)
    w2_io = jax.random.normal(k3, (2, 2), jnp.float32) * 0.5          # conv2 w [in, out]
    b2 = jax.random.normal(k4, (2,), jnp.float32) * 0.1               # conv2 bias

    out = output_forward(x, w1, gamma, beta, prelu_a, w2_io, b2)
    out = jax.block_until_ready(out)

    ref = reference_forward(x, w1, gamma, beta, prelu_a, w2_io, b2)
    # tolerance sized for the bf16 conv1 operands; any indexing / weight-mapping
    # bug would be O(0.1-1), far above this.
    np.testing.assert_allclose(np.asarray(out), np.asarray(ref),
                               atol=3e-3, rtol=3e-3)
    assert out.shape == (N * D * H * W, 2)
    print("KERNEL_OK")
</pallas_src>

<mosaic_0001>
module attributes {stable_mosaic.version = 11 : i64} {
  func.func @_conv1_matmul_kernel(%arg0: i32, %arg1: memref<1024x512xbf16, #tpu.memory_space<vmem>>, %arg2: memref<512x2xbf16, #tpu.memory_space<vmem>>, %arg3: memref<1024x2xf32, #tpu.memory_space<vmem>>) attributes {dimension_semantics = [#tpu.dimension_semantics<parallel>], iteration_bounds = array<i64: 1>, scalar_prefetch = 0 : i64, scratch_operands = 0 : i64, tpu.core_type = #tpu.core_type<tc>, window_params = [{transform_indices = @transform_0, window_bounds = array<i64: 1024, 512>}, {pipeline_mode = #tpu.pipeline_mode<synchronous>, transform_indices = @transform_1, window_bounds = array<i64: 512, 2>}, {transform_indices = @transform_2, window_bounds = array<i64: 1024, 2>}]} {
    %c0 = arith.constant 0 : index
    %c0_0 = arith.constant 0 : index
    %0 = vector.load %arg1[%c0, %c0_0] : memref<1024x512xbf16, #tpu.memory_space<vmem>>, vector<1024x512xbf16>
    %c0_1 = arith.constant 0 : index
    %c0_2 = arith.constant 0 : index
    %1 = vector.load %arg2[%c0_1, %c0_2] : memref<512x2xbf16, #tpu.memory_space<vmem>>, vector<512x2xbf16>
    %cst = arith.constant dense<0.000000e+00> : vector<1024x2xf32>
    %2 = tpu.matmul %0, %1, %cst {dimension_numbers = #tpu.dot_dimension_numbers<[1], [0], [0], [1], [0, 0, 1, 1], [], []>} : vector<1024x512xbf16>, vector<512x2xbf16>, vector<1024x2xf32> -> vector<1024x2xf32>
    %c0_3 = arith.constant 0 : index
    %c0_4 = arith.constant 0 : index
    %3 = vector.load %arg3[%c0_3, %c0_4] : memref<1024x2xf32, #tpu.memory_space<vmem>>, vector<1024x2xf32>
    tpu.vector_store %arg3[%c0_3, %c0_4], %2 {strides = array<i32>} : memref<1024x2xf32, #tpu.memory_space<vmem>>, vector<1024x2xf32>,
    return
  }
  func.func @transform_0(%arg0: i32) -> (i32, i32) {
    %c0_i32 = arith.constant 0 : i32
    %c0_i32_0 = arith.constant 0 : i32
    return %arg0, %c0_i32 : i32, i32
  }
  func.func @transform_1(%arg0: i32) -> (i32, i32) {
    %c0_i32 = arith.constant 0 : i32
    %c0_i32_0 = arith.constant 0 : i32
    %c0_i32_1 = arith.constant 0 : i32
    return %c0_i32, %c0_i32_0 : i32, i32
  }
  func.func @transform_2(%arg0: i32) -> (i32, i32) {
    %c0_i32 = arith.constant 0 : i32
    %c0_i32_0 = arith.constant 0 : i32
    return %arg0, %c0_i32 : i32, i32
  }
}

</mosaic_0001>

<llo_original>
// kernel: tpu_custom_call.1
$region0: #{tpu_custom_call.1}
  #allocation0 [shape = 'u32[]', space=smem, size = 0x4, offset = 0x4, fixed_abs, tag = 'smem constant byte address 0x4 - core index']
  #allocation1 [shape = 'u32[144,128]{1,0:T(1,128)}', space=vmem, size = 0x12000, scoped, tag = 'internal scratch']
  %s0 = inlined_call_operand.hbm [shape: bf16[1024,512], index: 0, kind: input, shape index: {}]
  %s1 = inlined_call_operand.vmem [shape: bf16[512,2], index: 1, kind: input, shape index: {}]
  %s2 = inlined_call_operand.vmem [shape: f32[1024,2], index: 2, kind: output, shape index: {}]
  %s3 = sld [smem:[#allocation0]]
  $region22: #{tpu_custom_call.1} parent=0
    _
  %s5 = ssub.s32 1, %s3
  %s6 = scalar_select 0, %s5, %s3
  $region1: #{tpu_custom_call.1} parent=0
    #allocation2 [shape = 'u8[1048576]{0}', space=vmem, size = 0x100000, scoped, tag = 'input window, operand 0, single buffered']
    #allocation3 [shape = 's32[1]{0}', space=sflag, size = 0x4, scoped, tag = 'scoped memory for tpu_custom_call.1']
    %7 = vsyncpa [#allocation3], 0
    // Predicated region
    $region2: #{tpu_custom_call.1} parent=1 // pred_check
      _
    $region3: #{tpu_custom_call.1} parent=1 // pred_check_branch
      %9 = sbr.rel (0) target = $region5
    $region4: #{tpu_custom_call.1} parent=1 // pred_region
      %s11 = ssub.s32 32768, 32768
      %12 = vsyncadd [#allocation3], %s11
      %s13 = sshll.u32 [#allocation2], 4
      %s14 = int_to_ptr.vmem [resolvable:$true] %s13
      %19 = dma.hbm_to_vmem [thread:$0]  %s0, 32768, %s14, [#allocation3], 256, 256, 16
    $region5: #{tpu_custom_call.1} parent=1 // pred_fallthru
      _
    // Predicated region
    $region6: #{tpu_custom_call.1} parent=1 // pred_check
      _
    $region7: #{tpu_custom_call.1} parent=1 // pred_check_branch
      %21 = sbr.rel (0) target = $region9
    $region8: #{tpu_custom_call.1} parent=1 // pred_region
      _
    $region9: #{tpu_custom_call.1} parent=1 // pred_fallthru
      _
    // Predicated region
    $region10: #{tpu_custom_call.1} parent=1 // pred_check
      _
    $region11: #{tpu_custom_call.1} parent=1 // pred_check_branch
      %23 = sbr.rel (0) target = $region13
    $region12: #{tpu_custom_call.1} parent=1 // pred_region
      %24 = dma.done [#allocation3], 32768
    $region13: #{tpu_custom_call.1} parent=1 // pred_fallthru
      _
    %v26 = vld [vmem:[#allocation2] sm:$0xff]
    %v27 = vld [vmem:[#allocation2 + $0x8] sm:$0xff]
    %v28 = vld [vmem:[#allocation2 + $0x10] sm:$0xff]
    %v29 = vld [vmem:[#allocation2 + $0x18] sm:$0xff]
    %v30 = vld [vmem:[#allocation2 + $0x20] sm:$0xff]
    %v31 = vld [vmem:[#allocation2 + $0x28] sm:$0xff]
    %v32 = vld [vmem:[#allocation2 + $0x30] sm:$0xff]
    %v33 = vld [vmem:[#allocation2 + $0x38] sm:$0xff]
    %v34 = vld [vmem:[#allocation2 + $0x40] sm:$0xff]
    %v35 = vld [vmem:[#allocation2 + $0x48] sm:$0xff]
    %v36 = vld [vmem:[#allocation2 + $0x50] sm:$0xff]
    %v37 = vld [vmem:[#allocation2 + $0x58] sm:$0xff]
    %v38 = vld [vmem:[#allocation2 + $0x60] sm:$0xff]
    %v39 = vld [vmem:[#allocation2 + $0x68] sm:$0xff]
    %v40 = vld [vmem:[#allocation2 + $0x70] sm:$0xff]
    %v41 = vld [vmem:[#allocation2 + $0x78] sm:$0xff]
    %v42 = vld [vmem:[#allocation2 + $0x80] sm:$0xff]
    %v43 = vld [vmem:[#allocation2 + $0x88] sm:$0xff]
    %v44 = vld [vmem:[#allocation2 + $0x90] sm:$0xff]
    %v45 = vld [vmem:[#allocation2 + $0x98] sm:$0xff]
    %v46 = vld [vmem:[#allocation2 + $0xa0] sm:$0xff]
    %v47 = vld [vmem:[#allocation2 + $0xa8] sm:$0xff]
    %v48 = vld [vmem:[#allocation2 + $0xb0] sm:$0xff]
    %v49 = vld [vmem:[#allocation2 + $0xb8] sm:$0xff]
    %v50 = vld [vmem:[#allocation2 + $0xc0] sm:$0xff]
    %v51 = vld [vmem:[#allocation2 + $0xc8] sm:$0xff]
    %v52 = vld [vmem:[#allocation2 + $0xd0] sm:$0xff]
    %v53 = vld [vmem:[#allocation2 + $0xd8] sm:$0xff]
    %v54 = vld [vmem:[#allocation2 + $0xe0] sm:$0xff]
    %v55 = vld [vmem:[#allocation2 + $0xe8] sm:$0xff]
    %v56 = vld [vmem:[#allocation2 + $0xf0] sm:$0xff]
    %v57 = vld [vmem:[#allocation2 + $0xf8] sm:$0xff]
    %v58 = vld [vmem:[#allocation2 + $0x100] sm:$0xff]
    %v59 = vld [vmem:[#allocation2 + $0x108] sm:$0xff]
    %v60 = vld [vmem:[#allocation2 + $0x110] sm:$0xff]
    %v61 = vld [vmem:[#allocation2 + $0x118] sm:$0xff]
    %v62 = vld [vmem:[#allocation2 + $0x120] sm:$0xff]
    %v63 = vld [vmem:[#allocation2 + $0x128] sm:$0xff]
    %v64 = vld [vmem:[#allocation2 + $0x130] sm:$0xff]
    %v65 = vld [vmem:[#allocation2 + $0x138] sm:$0xff]
    %v66 = vld [vmem:[#allocation2 + $0x140] sm:$0xff]
    %v67 = vld [vmem:[#allocation2 + $0x148] sm:$0xff]
    %v68 = vld [vmem:[#allocation2 + $0x150] sm:$0xff]
    %v69 = vld [vmem:[#allocation2 + $0x158] sm:$0xff]
    %v70 = vld [vmem:[#allocation2 + $0x160] sm:$0xff]
    %v71 = vld [vmem:[#allocation2 + $0x168] sm:$0xff]
    %v72 = vld [vmem:[#allocation2 + $0x170] sm:$0xff]
    %v73 = vld [vmem:[#allocation2 + $0x178] sm:$0xff]
    %v74 = vld [vmem:[#allocation2 + $0x180] sm:$0xff]
    %v75 = vld [vmem:[#allocation2 + $0x188] sm:$0xff]
    %v76 = vld [vmem:[#allocation2 + $0x190] sm:$0xff]
    %v77 = vld [vmem:[#allocation2 + $0x198] sm:$0xff]
    %v78 = vld [vmem:[#allocation2 + $0x1a0] sm:$0xff]
    %v79 = vld [vmem:[#allocation2 + $0x1a8] sm:$0xff]
    %v80 = vld [vmem:[#allocation2 + $0x1b0] sm:$0xff]
    %v81 = vld [vmem:[#allocation2 + $0x1b8] sm:$0xff]
    %v82 = vld [vmem:[#allocation2 + $0x1c0] sm:$0xff]
    %v83 = vld [vmem:[#allocation2 + $0x1c8] sm:$0xff]
    %v84 = vld [vmem:[#allocation2 + $0x1d0] sm:$0xff]
    %v85 = vld [vmem:[#allocation2 + $0x1d8] sm:$0xff]
    %v86 = vld [vmem:[#allocation2 + $0x1e0] sm:$0xff]
    %v87 = vld [vmem:[#allocation2 + $0x1e8] sm:$0xff]
    %v88 = vld [vmem:[#allocation2 + $0x1f0] sm:$0xff]
    %v89 = vld [vmem:[#allocation2 + $0x1f8] sm:$0xff]
    %v90 = vld [vmem:[#allocation2 + $0x200] sm:$0xff]
    %v91 = vld [vmem:[#allocation2 + $0x208] sm:$0xff]
    %v92 = vld [vmem:[#allocation2 + $0x210] sm:$0xff]
    %v93 = vld [vmem:[#allocation2 + $0x218] sm:$0xff]
    %v94 = vld [vmem:[#allocation2 + $0x220] sm:$0xff]
    %v95 = vld [vmem:[#allocation2 + $0x228] sm:$0xff]
    %v96 = vld [vmem:[#allocation2 + $0x230] sm:$0xff]
    %v97 = vld [vmem:[#allocation2 + $0x238] sm:$0xff]
    %v98 = vld [vmem:[#allocation2 + $0x240] sm:$0xff]
    %v99 = vld [vmem:[#allocation2 + $0x248] sm:$0xff]
    %v100 = vld [vmem:[#allocation2 + $0x250] sm:$0xff]
    %v101 = vld [vmem:[#allocation2 + $0x258] sm:$0xff]
    %v102 = vld [vmem:[#allocation2 + $0x260] sm:$0xff]
    %v103 = vld [vmem:[#allocation2 + $0x268] sm:$0xff]
    %v104 = vld [vmem:[#allocation2 + $0x270] sm:$0xff]
    %v105 = vld [vmem:[#allocation2 + $0x278] sm:$0xff]
    %v106 = vld [vmem:[#allocation2 + $0x280] sm:$0xff]
    %v107 = vld [vmem:[#allocation2 + $0x288] sm:$0xff]
    %v108 = vld [vmem:[#allocation2 + $0x290] sm:$0xff]
    %v109 = vld [vmem:[#allocation2 + $0x298] sm:$0xff]
    %v110 = vld [vmem:[#allocation2 + $0x2a0] sm:$0xff]
    %v111 = vld [vmem:[#allocation2 + $0x2a8] sm:$0xff]
    %v112 = vld [vmem:[#allocation2 + $0x2b0] sm:$0xff]
    %v113 = vld [vmem:[#allocation2 + $0x2b8] sm:$0xff]
    %v114 = vld [vmem:[#allocation2 + $0x2c0] sm:$0xff]
    %v115 = vld [vmem:[#allocation2 + $0x2c8] sm:$0xff]
    %v116 = vld [vmem:[#allocation2 + $0x2d0] sm:$0xff]
    %v117 = vld [vmem:[#allocation2 + $0x2d8] sm:$0xff]
    %v118 = vld [vmem:[#allocation2 + $0x2e0] sm:$0xff]
    %v119 = vld [vmem:[#allocation2 + $0x2e8] sm:$0xff]
    %v120 = vld [vmem:[#allocation2 + $0x2f0] sm:$0xff]
    %v121 = vld [vmem:[#allocation2 + $0x2f8] sm:$0xff]
    %v122 = vld [vmem:[#allocation2 + $0x300] sm:$0xff]
    %v123 = vld [vmem:[#allocation2 + $0x308] sm:$0xff]
    %v124 = vld [vmem:[#allocation2 + $0x310] sm:$0xff]
    %v125 = vld [vmem:[#allocation2 + $0x318] sm:$0xff]
    %v126 = vld [vmem:[#allocation2 + $0x320] sm:$0xff]
    %v127 = vld [vmem:[#allocation2 + $0x328] sm:$0xff]
    %v128 = vld [vmem:[#allocation2 + $0x330] sm:$0xff]
    %v129 = vld [vmem:[#allocation2 + $0x338] sm:$0xff]
    %v130 = vld [vmem:[#allocation2 + $0x340] sm:$0xff]
    %v131 = vld [vmem:[#allocation2 + $0x348] sm:$0xff]
    %v132 = vld [vmem:[#allocation2 + $0x350] sm:$0xff]
    %v133 = vld [vmem:[#allocation2 + $0x358] sm:$0xff]
    %v134 = vld [vmem:[#allocation2 + $0x360] sm:$0xff]
    %v135 = vld [vmem:[#allocation2 + $0x368] sm:$0xff]
    %v136 = vld [vmem:[#allocation2 + $0x370] sm:$0xff]
    %v137 = vld [vmem:[#allocation2 + $0x378] sm:$0xff]
    %v138 = vld [vmem:[#allocation2 + $0x380] sm:$0xff]
    %v139 = vld [vmem:[#allocation2 + $0x388] sm:$0xff]
    %v140 = vld [vmem:[#allocation2 + $0x390] sm:$0xff]
    %v141 = vld [vmem:[#allocation2 + $0x398] sm:$0xff]
    %v142 = vld [vmem:[#allocation2 + $0x3a0] sm:$0xff]
    %v143 = vld [vmem:[#allocation2 + $0x3a8] sm:$0xff]
    %v144 = vld [vmem:[#allocation2 + $0x3b0] sm:$0xff]
    %v145 = vld [vmem:[#allocation2 + $0x3b8] sm:$0xff]
    %v146 = vld [vmem:[#allocation2 + $0x3c0] sm:$0xff]
    %v147 = vld [vmem:[#allocation2 + $0x3c8] sm:$0xff]
    %v148 = vld [vmem:[#allocation2 + $0x3d0] sm:$0xff]
    %v149 = vld [vmem:[#allocation2 + $0x3d8] sm:$0xff]
    %v150 = vld [vmem:[#allocation2 + $0x3e0] sm:$0xff]
    %v151 = vld [vmem:[#allocation2 + $0x3e8] sm:$0xff]
    %v152 = vld [vmem:[#allocation2 + $0x3f0] sm:$0xff]
    %v153 = vld [vmem:[#allocation2 + $0x3f8] sm:$0xff]
    %v154 = vld [vmem:[#allocation2 + $0x400] sm:$0xff]
    %v155 = vld [vmem:[#allocation2 + $0x408] sm:$0xff]
    %v156 = vld [vmem:[#allocation2 + $0x410] sm:$0xff]
    %v157 = vld [vmem:[#allocation2 + $0x418] sm:$0xff]
    %v158 = vld [vmem:[#allocation2 + $0x420] sm:$0xff]
    %v159 = vld [vmem:[#allocation2 + $0x428] sm:$0xff]
    %v160 = vld [vmem:[#allocation2 + $0x430] sm:$0xff]
    %v161 = vld [vmem:[#allocation2 + $0x438] sm:$0xff]
    %v162 = vld [vmem:[#allocation2 + $0x440] sm:$0xff]
    %v163 = vld [vmem:[#allocation2 + $0x448] sm:$0xff]
    %v164 = vld [vmem:[#allocation2 + $0x450] sm:$0xff]
    %v165 = vld [vmem:[#allocation2 + $0x458] sm:$0xff]
    %v166 = vld [vmem:[#allocation2 + $0x460] sm:$0xff]
    %v167 = vld [vmem:[#allocation2 + $0x468] sm:$0xff]
    %v168 = vld [vmem:[#allocation2 + $0x470] sm:$0xff]
    %v169 = vld [vmem:[#allocation2 + $0x478] sm:$0xff]
    %v170 = vld [vmem:[#allocation2 + $0x480] sm:$0xff]
    %v171 = vld [vmem:[#allocation2 + $0x488] sm:$0xff]
    %v172 = vld [vmem:[#allocation2 + $0x490] sm:$0xff]
    %v173 = vld [vmem:[#allocation2 + $0x498] sm:$0xff]
    %v174 = vld [vmem:[#allocation2 + $0x4a0] sm:$0xff]
    %v175 = vld [vmem:[#allocation2 + $0x4a8] sm:$0xff]
    %v176 = vld [vmem:[#allocation2 + $0x4b0] sm:$0xff]
    %v177 = vld [vmem:[#allocation2 + $0x4b8] sm:$0xff]
    %v178 = vld [vmem:[#allocation2 + $0x4c0] sm:$0xff]
    %v179 = vld [vmem:[#allocation2 + $0x4c8] sm:$0xff]
    %v180 = vld [vmem:[#allocation2 + $0x4d0] sm:$0xff]
    %v181 = vld [vmem:[#allocation2 + $0x4d8] sm:$0xff]
    %v182 = vld [vmem:[#allocation2 + $0x4e0] sm:$0xff]
    %v183 = vld [vmem:[#allocation2 + $0x4e8] sm:$0xff]
    %v184 = vld [vmem:[#allocation2 + $0x4f0] sm:$0xff]
    %v185 = vld [vmem:[#allocation2 + $0x4f8] sm:$0xff]
    %v186 = vld [vmem:[#allocation2 + $0x500] sm:$0xff]
    %v187 = vld [vmem:[#allocation2 + $0x508] sm:$0xff]
    %v188 = vld [vmem:[#allocation2 + $0x510] sm:$0xff]
    %v189 = vld [vmem:[#allocation2 + $0x518] sm:$0xff]
    %v190 = vld [vmem:[#allocation2 + $0x520] sm:$0xff]
    %v191 = vld [vmem:[#allocation2 + $0x528] sm:$0xff]
    %v192 = vld [vmem:[#allocation2 + $0x530] sm:$0xff]
    %v193 = vld [vmem:[#allocation2 + $0x538] sm:$0xff]
    %v194 = vld [vmem:[#allocation2 + $0x540] sm:$0xff]
    %v195 = vld [vmem:[#allocation2 + $0x548] sm:$0xff]
    %v196 = vld [vmem:[#allocation2 + $0x550] sm:$0xff]
    %v197 = vld [vmem:[#allocation2 + $0x558] sm:$0xff]
    %v198 = vld [vmem:[#allocation2 + $0x560] sm:$0xff]
    %v199 = vld [vmem:[#allocation2 + $0x568] sm:$0xff]
    %v200 = vld [vmem:[#allocation2 + $0x570] sm:$0xff]
    %v201 = vld [vmem:[#allocation2 + $0x578] sm:$0xff]
    %v202 = vld [vmem:[#allocation2 + $0x580] sm:$0xff]
    %v203 = vld [vmem:[#allocation2 + $0x588] sm:$0xff]
    %v204 = vld [vmem:[#allocation2 + $0x590] sm:$0xff]
    %v205 = vld [vmem:[#allocation2 + $0x598] sm:$0xff]
    %v206 = vld [vmem:[#allocation2 + $0x5a0] sm:$0xff]
    %v207 = vld [vmem:[#allocation2 + $0x5a8] sm:$0xff]
    %v208 = vld [vmem:[#allocation2 + $0x5b0] sm:$0xff]
    %v209 = vld [vmem:[#allocation2 + $0x5b8] sm:$0xff]
    %v210 = vld [vmem:[#allocation2 + $0x5c0] sm:$0xff]
    %v211 = vld [vmem:[#allocation2 + $0x5c8] sm:$0xff]
    %v212 = vld [vmem:[#allocation2 + $0x5d0] sm:$0xff]
    %v213 = vld [vmem:[#allocation2 + $0x5d8] sm:$0xff]
    %v214 = vld [vmem:[#allocation2 + $0x5e0] sm:$0xff]
    %v215 = vld [vmem:[#allocation2 + $0x5e8] sm:$0xff]
    %v216 = vld [vmem:[#allocation2 + $0x5f0] sm:$0xff]
    %v217 = vld [vmem:[#allocation2 + $0x5f8] sm:$0xff]
    %v218 = vld [vmem:[#allocation2 + $0x600] sm:$0xff]
    %v219 = vld [vmem:[#allocation2 + $0x608] sm:$0xff]
    %v220 = vld [vmem:[#allocation2 + $0x610] sm:$0xff]
    %v221 = vld [vmem:[#allocation2 + $0x618] sm:$0xff]
    %v222 = vld [vmem:[#allocation2 + $0x620] sm:$0xff]
    %v223 = vld [vmem:[#allocation2 + $0x628] sm:$0xff]
    %v224 = vld [vmem:[#allocation2 + $0x630] sm:$0xff]
    %v225 = vld [vmem:[#allocation2 + $0x638] sm:$0xff]
    %v226 = vld [vmem:[#allocation2 + $0x640] sm:$0xff]
    %v227 = vld [vmem:[#allocation2 + $0x648] sm:$0xff]
    %v228 = vld [vmem:[#allocation2 + $0x650] sm:$0xff]
    %v229 = vld [vmem:[#allocation2 + $0x658] sm:$0xff]
    %v230 = vld [vmem:[#allocation2 + $0x660] sm:$0xff]
    %v231 = vld [vmem:[#allocation2 + $0x668] sm:$0xff]
    %v232 = vld [vmem:[#allocation2 + $0x670] sm:$0xff]
    %v233 = vld [vmem:[#allocation2 + $0x678] sm:$0xff]
    %v234 = vld [vmem:[#allocation2 + $0x680] sm:$0xff]
    %v235 = vld [vmem:[#allocation2 + $0x688] sm:$0xff]
    %v236 = vld [vmem:[#allocation2 + $0x690] sm:$0xff]
    %v237 = vld [vmem:[#allocation2 + $0x698] sm:$0xff]
    %v238 = vld [vmem:[#allocation2 + $0x6a0] sm:$0xff]
    %v239 = vld [vmem:[#allocation2 + $0x6a8] sm:$0xff]
    %v240 = vld [vmem:[#allocation2 + $0x6b0] sm:$0xff]
    %v241 = vld [vmem:[#allocation2 + $0x6b8] sm:$0xff]
    %v242 = vld [vmem:[#allocation2 + $0x6c0] sm:$0xff]
    %v243 = vld [vmem:[#allocation2 + $0x6c8] sm:$0xff]
    %v244 = vld [vmem:[#allocation2 + $0x6d0] sm:$0xff]
    %v245 = vld [vmem:[#allocation2 + $0x6d8] sm:$0xff]
    %v246 = vld [vmem:[#allocation2 + $0x6e0] sm:$0xff]
    %v247 = vld [vmem:[#allocation2 + $0x6e8] sm:$0xff]
    %v248 = vld [vmem:[#allocation2 + $0x6f0] sm:$0xff]
    %v249 = vld [vmem:[#allocation2 + $0x6f8] sm:$0xff]
    %v250 = vld [vmem:[#allocation2 + $0x700] sm:$0xff]
    %v251 = vld [vmem:[#allocation2 + $0x708] sm:$0xff]
    %v252 = vld [vmem:[#allocation2 + $0x710] sm:$0xff]
    %v253 = vld [vmem:[#allocation2 + $0x718] sm:$0xff]
    %v254 = vld [vmem:[#allocation2 + $0x720] sm:$0xff]
    %v255 = vld [vmem:[#allocation2 + $0x728] sm:$0xff]
    %v256 = vld [vmem:[#allocation2 + $0x730] sm:$0xff]
    %v257 = vld [vmem:[#allocation2 + $0x738] sm:$0xff]
    %v258 = vld [vmem:[#allocation2 + $0x740] sm:$0xff]
    %v259 = vld [vmem:[#allocation2 + $0x748] sm:$0xff]
    %v260 = vld [vmem:[#allocation2 + $0x750] sm:$0xff]
    %v261 = vld [vmem:[#allocation2 + $0x758] sm:$0xff]
    %v262 = vld [vmem:[#allocation2 + $0x760] sm:$0xff]
    %v263 = vld [vmem:[#allocation2 + $0x768] sm:$0xff]
    %v264 = vld [vmem:[#allocation2 + $0x770] sm:$0xff]
    %v265 = vld [vmem:[#allocation2 + $0x778] sm:$0xff]
    %v266 = vld [vmem:[#allocation2 + $0x780] sm:$0xff]
    %v267 = vld [vmem:[#allocation2 + $0x788] sm:$0xff]
    %v268 = vld [vmem:[#allocation2 + $0x790] sm:$0xff]
    %v269 = vld [vmem:[#allocation2 + $0x798] sm:$0xff]
    %v270 = vld [vmem:[#allocation2 + $0x7a0] sm:$0xff]
    %v271 = vld [vmem:[#allocation2 + $0x7a8] sm:$0xff]
    %v272 = vld [vmem:[#allocation2 + $0x7b0] sm:$0xff]
    %v273 = vld [vmem:[#allocation2 + $0x7b8] sm:$0xff]
    %v274 = vld [vmem:[#allocation2 + $0x7c0] sm:$0xff]
    %v275 = vld [vmem:[#allocation2 + $0x7c8] sm:$0xff]
    %v276 = vld [vmem:[#allocation2 + $0x7d0] sm:$0xff]
    %v277 = vld [vmem:[#allocation2 + $0x7d8] sm:$0xff]
    %v278 = vld [vmem:[#allocation2 + $0x7e0] sm:$0xff]
    %v279 = vld [vmem:[#allocation2 + $0x7e8] sm:$0xff]
    %v280 = vld [vmem:[#allocation2 + $0x7f0] sm:$0xff]
    %v281 = vld [vmem:[#allocation2 + $0x7f8] sm:$0xff]
    %v282 = vld [vmem:[%s1] sm:$0xf]
    %v283 = vld [vmem:[%s1 + $0x4] sm:$0xf]
    %v284 = vld [vmem:[%s1 + $0x8] sm:$0xf]
    %v285 = vld [vmem:[%s1 + $0xc] sm:$0xf]
    %v286 = vld [vmem:[%s1 + $0x10] sm:$0xf]
    %v287 = vld [vmem:[%s1 + $0x14] sm:$0xf]
    %v288 = vld [vmem:[%s1 + $0x18] sm:$0xf]
    %v289 = vld [vmem:[%s1 + $0x1c] sm:$0xf]
    %v290 = vld [vmem:[%s1 + $0x20] sm:$0xf]
    %v291 = vld [vmem:[%s1 + $0x24] sm:$0xf]
    %v292 = vld [vmem:[%s1 + $0x28] sm:$0xf]
    %v293 = vld [vmem:[%s1 + $0x2c] sm:$0xf]
    %v294 = vld [vmem:[%s1 + $0x30] sm:$0xf]
    %v295 = vld [vmem:[%s1 + $0x34] sm:$0xf]
    %v296 = vld [vmem:[%s1 + $0x38] sm:$0xf]
    %v297 = vld [vmem:[%s1 + $0x3c] sm:$0xf]
    %v298 = vld [vmem:[%s1 + $0x40] sm:$0xf]
    %v299 = vld [vmem:[%s1 + $0x44] sm:$0xf]
    %v300 = vld [vmem:[%s1 + $0x48] sm:$0xf]
    %v301 = vld [vmem:[%s1 + $0x4c] sm:$0xf]
    %v302 = vld [vmem:[%s1 + $0x50] sm:$0xf]
    %v303 = vld [vmem:[%s1 + $0x54] sm:$0xf]
    %v304 = vld [vmem:[%s1 + $0x58] sm:$0xf]
    %v305 = vld [vmem:[%s1 + $0x5c] sm:$0xf]
    %v306 = vld [vmem:[%s1 + $0x60] sm:$0xf]
    %v307 = vld [vmem:[%s1 + $0x64] sm:$0xf]
    %v308 = vld [vmem:[%s1 + $0x68] sm:$0xf]
    %v309 = vld [vmem:[%s1 + $0x6c] sm:$0xf]
    %v310 = vld [vmem:[%s1 + $0x70] sm:$0xf]
    %v311 = vld [vmem:[%s1 + $0x74] sm:$0xf]
    %v312 = vld [vmem:[%s1 + $0x78] sm:$0xf]
    %v313 = vld [vmem:[%s1 + $0x7c] sm:$0xf]
    %v314 = vld [vmem:[%s1 + $0x80] sm:$0xf]
    %v315 = vld [vmem:[%s1 + $0x84] sm:$0xf]
    %v316 = vld [vmem:[%s1 + $0x88] sm:$0xf]
    %v317 = vld [vmem:[%s1 + $0x8c] sm:$0xf]
    %v318 = vld [vmem:[%s1 + $0x90] sm:$0xf]
    %v319 = vld [vmem:[%s1 + $0x94] sm:$0xf]
    %v320 = vld [vmem:[%s1 + $0x98] sm:$0xf]
    %v321 = vld [vmem:[%s1 + $0x9c] sm:$0xf]
    %v322 = vld [vmem:[%s1 + $0xa0] sm:$0xf]
    %v323 = vld [vmem:[%s1 + $0xa4] sm:$0xf]
    %v324 = vld [vmem:[%s1 + $0xa8] sm:$0xf]
    %v325 = vld [vmem:[%s1 + $0xac] sm:$0xf]
    %v326 = vld [vmem:[%s1 + $0xb0] sm:$0xf]
    %v327 = vld [vmem:[%s1 + $0xb4] sm:$0xf]
    %v328 = vld [vmem:[%s1 + $0xb8] sm:$0xf]
    %v329 = vld [vmem:[%s1 + $0xbc] sm:$0xf]
    %v330 = vld [vmem:[%s1 + $0xc0] sm:$0xf]
    %v331 = vld [vmem:[%s1 + $0xc4] sm:$0xf]
    %v332 = vld [vmem:[%s1 + $0xc8] sm:$0xf]
    %v333 = vld [vmem:[%s1 + $0xcc] sm:$0xf]
    %v334 = vld [vmem:[%s1 + $0xd0] sm:$0xf]
    %v335 = vld [vmem:[%s1 + $0xd4] sm:$0xf]
    %v336 = vld [vmem:[%s1 + $0xd8] sm:$0xf]
    %v337 = vld [vmem:[%s1 + $0xdc] sm:$0xf]
    %v338 = vld [vmem:[%s1 + $0xe0] sm:$0xf]
    %v339 = vld [vmem:[%s1 + $0xe4] sm:$0xf]
    %v340 = vld [vmem:[%s1 + $0xe8] sm:$0xf]
    %v341 = vld [vmem:[%s1 + $0xec] sm:$0xf]
    %v342 = vld [vmem:[%s1 + $0xf0] sm:$0xf]
    %v343 = vld [vmem:[%s1 + $0xf4] sm:$0xf]
    %v344 = vld [vmem:[%s1 + $0xf8] sm:$0xf]
    %v345 = vld [vmem:[%s1 + $0xfc] sm:$0xf]
    %v602 = vunpack.c.l.b16 %v26
    %v603 = vunpack.c.h.b16 %v26
    %v604 = vunpack.c.l.b16 %v27
    %v605 = vunpack.c.h.b16 %v27
    %v606 = vunpack.c.l.b16 %v28
    %v607 = vunpack.c.h.b16 %v28
    %v608 = vunpack.c.l.b16 %v29
    %v609 = vunpack.c.h.b16 %v29
    %v610 = vunpack.c.l.b16 %v30
    %v611 = vunpack.c.h.b16 %v30
    %v612 = vunpack.c.l.b16 %v31
    %v613 = vunpack.c.h.b16 %v31
    %v614 = vunpack.c.l.b16 %v32
    %v615 = vunpack.c.h.b16 %v32
    %v616 = vunpack.c.l.b16 %v33
    %v617 = vunpack.c.h.b16 %v33
    %v618 = vunpack.c.l.b16 %v34
    %v619 = vunpack.c.h.b16 %v34
    %v620 = vunpack.c.l.b16 %v35
    %v621 = vunpack.c.h.b16 %v35
    %v622 = vunpack.c.l.b16 %v36
    %v623 = vunpack.c.h.b16 %v36
    %v624 = vunpack.c.l.b16 %v37
    %v625 = vunpack.c.h.b16 %v37
    %v626 = vunpack.c.l.b16 %v38
    %v627 = vunpack.c.h.b16 %v38
    %v628 = vunpack.c.l.b16 %v39
    %v629 = vunpack.c.h.b16 %v39
    %v630 = vunpack.c.l.b16 %v40
    %v631 = vunpack.c.h.b16 %v40
    %v632 = vunpack.c.l.b16 %v41
    %v633 = vunpack.c.h.b16 %v41
    %v634 = vunpack.c.l.b16 %v42
    %v635 = vunpack.c.h.b16 %v42
    %v636 = vunpack.c.l.b16 %v43
    %v637 = vunpack.c.h.b16 %v43
    %v638 = vunpack.c.l.b16 %v44
    %v639 = vunpack.c.h.b16 %v44
    %v640 = vunpack.c.l.b16 %v45
    %v641 = vunpack.c.h.b16 %v45
    %v642 = vunpack.c.l.b16 %v46
    %v643 = vunpack.c.h.b16 %v46
    %v644 = vunpack.c.l.b16 %v47
    %v645 = vunpack.c.h.b16 %v47
    %v646 = vunpack.c.l.b16 %v48
    %v647 = vunpack.c.h.b16 %v48
    %v648 = vunpack.c.l.b16 %v49
    %v649 = vunpack.c.h.b16 %v49
    %v650 = vunpack.c.l.b16 %v50
    %v651 = vunpack.c.h.b16 %v50
    %v652 = vunpack.c.l.b16 %v51
    %v653 = vunpack.c.h.b16 %v51
    %v654 = vunpack.c.l.b16 %v52
    %v655 = vunpack.c.h.b16 %v52
    %v656 = vunpack.c.l.b16 %v53
    %v657 = vunpack.c.h.b16 %v53
    %v658 = vunpack.c.l.b16 %v54
    %v659 = vunpack.c.h.b16 %v54
    %v660 = vunpack.c.l.b16 %v55
    %v661 = vunpack.c.h.b16 %v55
    %v662 = vunpack.c.l.b16 %v56
    %v663 = vunpack.c.h.b16 %v56
    %v664 = vunpack.c.l.b16 %v57
    %v665 = vunpack.c.h.b16 %v57
    %v666 = vunpack.c.l.b16 %v58
    %v667 = vunpack.c.h.b16 %v58
    %v668 = vunpack.c.l.b16 %v59
    %v669 = vunpack.c.h.b16 %v59
    %v670 = vunpack.c.l.b16 %v60
    %v671 = vunpack.c.h.b16 %v60
    %v672 = vunpack.c.l.b16 %v61
    %v673 = vunpack.c.h.b16 %v61
    %v674 = vunpack.c.l.b16 %v62
    %v675 = vunpack.c.h.b16 %v62
    %v676 = vunpack.c.l.b16 %v63
    %v677 = vunpack.c.h.b16 %v63
    %v678 = vunpack.c.l.b16 %v64
    %v679 = vunpack.c.h.b16 %v64
    %v680 = vunpack.c.l.b16 %v65
    %v681 = vunpack.c.h.b16 %v65
    %v682 = vunpack.c.l.b16 %v66
    %v683 = vunpack.c.h.b16 %v66
    %v684 = vunpack.c.l.b16 %v67
    %v685 = vunpack.c.h.b16 %v67
    %v686 = vunpack.c.l.b16 %v68
    %v687 = vunpack.c.h.b16 %v68
    %v688 = vunpack.c.l.b16 %v69
    %v689 = vunpack.c.h.b16 %v69
    %v690 = vunpack.c.l.b16 %v70
    %v691 = vunpack.c.h.b16 %v70
    %v692 = vunpack.c.l.b16 %v71
    %v693 = vunpack.c.h.b16 %v71
    %v694 = vunpack.c.l.b16 %v72
    %v695 = vunpack.c.h.b16 %v72
    %v696 = vunpack.c.l.b16 %v73
    %v697 = vunpack.c.h.b16 %v73
    %v698 = vunpack.c.l.b16 %v74
    %v699 = vunpack.c.h.b16 %v74
    %v700 = vunpack.c.l.b16 %v75
    %v701 = vunpack.c.h.b16 %v75
    %v702 = vunpack.c.l.b16 %v76
    %v703 = vunpack.c.h.b16 %v76
    %v704 = vunpack.c.l.b16 %v77
    %v705 = vunpack.c.h.b16 %v77
    %v706 = vunpack.c.l.b16 %v78
    %v707 = vunpack.c.h.b16 %v78
    %v708 = vunpack.c.l.b16 %v79
    %v709 = vunpack.c.h.b16 %v79
    %v710 = vunpack.c.l.b16 %v80
    %v711 = vunpack.c.h.b16 %v80
    %v712 = vunpack.c.l.b16 %v81
    %v713 = vunpack.c.h.b16 %v81
    %v714 = vunpack.c.l.b16 %v82
    %v715 = vunpack.c.h.b16 %v82
    %v716 = vunpack.c.l.b16 %v83
    %v717 = vunpack.c.h.b16 %v83
    %v718 = vunpack.c.l.b16 %v84
    %v719 = vunpack.c.h.b16 %v84
    %v720 = vunpack.c.l.b16 %v85
    %v721 = vunpack.c.h.b16 %v85
    %v722 = vunpack.c.l.b16 %v86
    %v723 = vunpack.c.h.b16 %v86
    %v724 = vunpack.c.l.b16 %v87
    %v725 = vunpack.c.h.b16 %v87
    %v726 = vunpack.c.l.b16 %v88
    %v727 = vunpack.c.h.b16 %v88
    %v728 = vunpack.c.l.b16 %v89
    %v729 = vunpack.c.h.b16 %v89
    %v730 = vunpack.c.l.b16 %v90
    %v731 = vunpack.c.h.b16 %v90
    %v732 = vunpack.c.l.b16 %v91
    %v733 = vunpack.c.h.b16 %v91
    %v734 = vunpack.c.l.b16 %v92
    %v735 = vunpack.c.h.b16 %v92
    %v736 = vunpack.c.l.b16 %v93
    %v737 = vunpack.c.h.b16 %v93
    %v738 = vunpack.c.l.b16 %v94
    %v739 = vunpack.c.h.b16 %v94
    %v740 = vunpack.c.l.b16 %v95
    %v741 = vunpack.c.h.b16 %v95
    %v742 = vunpack.c.l.b16 %v96
    %v743 = vunpack.c.h.b16 %v96
    %v744 = vunpack.c.l.b16 %v97
    %v745 = vunpack.c.h.b16 %v97
    %v746 = vunpack.c.l.b16 %v98
    %v747 = vunpack.c.h.b16 %v98
    %v748 = vunpack.c.l.b16 %v99
    %v749 = vunpack.c.h.b16 %v99
    %v750 = vunpack.c.l.b16 %v100
    %v751 = vunpack.c.h.b16 %v100
    %v752 = vunpack.c.l.b16 %v101
    %v753 = vunpack.c.h.b16 %v101
    %v754 = vunpack.c.l.b16 %v102
    %v755 = vunpack.c.h.b16 %v102
    %v756 = vunpack.c.l.b16 %v103
    %v757 = vunpack.c.h.b16 %v103
    %v758 = vunpack.c.l.b16 %v104
    %v759 = vunpack.c.h.b16 %v104
    %v760 = vunpack.c.l.b16 %v105
    %v761 = vunpack.c.h.b16 %v105
    %v762 = vunpack.c.l.b16 %v106
    %v763 = vunpack.c.h.b16 %v106
    %v764 = vunpack.c.l.b16 %v107
    %v765 = vunpack.c.h.b16 %v107
    %v766 = vunpack.c.l.b16 %v108
    %v767 = vunpack.c.h.b16 %v108
    %v768 = vunpack.c.l.b16 %v109
    %v769 = vunpack.c.h.b16 %v109
    %v770 = vunpack.c.l.b16 %v110
    %v771 = vunpack.c.h.b16 %v110
    %v772 = vunpack.c.l.b16 %v111
    %v773 = vunpack.c.h.b16 %v111
    %v774 = vunpack.c.l.b16 %v112
    %v775 = vunpack.c.h.b16 %v112
    %v776 = vunpack.c.l.b16 %v113
    %v777 = vunpack.c.h.b16 %v113
    %v778 = vunpack.c.l.b16 %v114
    %v779 = vunpack.c.h.b16 %v114
    %v780 = vunpack.c.l.b16 %v115
    %v781 = vunpack.c.h.b16 %v115
    %v782 = vunpack.c.l.b16 %v116
    %v783 = vunpack.c.h.b16 %v116
    %v784 = vunpack.c.l.b16 %v117
    %v785 = vunpack.c.h.b16 %v117
    %v786 = vunpack.c.l.b16 %v118
    %v787 = vunpack.c.h.b16 %v118
    %v788 = vunpack.c.l.b16 %v119
    %v789 = vunpack.c.h.b16 %v119
    %v790 = vunpack.c.l.b16 %v120
    %v791 = vunpack.c.h.b16 %v120
    %v792 = vunpack.c.l.b16 %v121
    %v793 = vunpack.c.h.b16 %v121
    %v794 = vunpack.c.l.b16 %v122
    %v795 = vunpack.c.h.b16 %v122
    %v796 = vunpack.c.l.b16 %v123
    %v797 = vunpack.c.h.b16 %v123
    %v798 = vunpack.c.l.b16 %v124
    %v799 = vunpack.c.h.b16 %v124
    %v800 = vunpack.c.l.b16 %v125
    %v801 = vunpack.c.h.b16 %v125
    %v802 = vunpack.c.l.b16 %v126
    %v803 = vunpack.c.h.b16 %v126
    %v804 = vunpack.c.l.b16 %v127
    %v805 = vunpack.c.h.b16 %v127
    %v806 = vunpack.c.l.b16 %v128
    %v807 = vunpack.c.h.b16 %v128
    %v808 = vunpack.c.l.b16 %v129
    %v809 = vunpack.c.h.b16 %v129
    %v810 = vunpack.c.l.b16 %v130
    %v811 = vunpack.c.h.b16 %v130
    %v812 = vunpack.c.l.b16 %v131
    %v813 = vunpack.c.h.b16 %v131
    %v814 = vunpack.c.l.b16 %v132
    %v815 = vunpack.c.h.b16 %v132
    %v816 = vunpack.c.l.b16 %v133
    %v817 = vunpack.c.h.b16 %v133
    %v818 = vunpack.c.l.b16 %v134
    %v819 = vunpack.c.h.b16 %v134
    %v820 = vunpack.c.l.b16 %v135
    %v821 = vunpack.c.h.b16 %v135
    %v822 = vunpack.c.l.b16 %v136
    %v823 = vunpack.c.h.b16 %v136
    %v824 = vunpack.c.l.b16 %v137
    %v825 = vunpack.c.h.b16 %v137
    %v826 = vunpack.c.l.b16 %v138
    %v827 = vunpack.c.h.b16 %v138
    %v828 = vunpack.c.l.b16 %v139
    %v829 = vunpack.c.h.b16 %v139
    %v830 = vunpack.c.l.b16 %v140
    %v831 = vunpack.c.h.b16 %v140
    %v832 = vunpack.c.l.b16 %v141
    %v833 = vunpack.c.h.b16 %v141
    %v834 = vunpack.c.l.b16 %v142
    %v835 = vunpack.c.h.b16 %v142
    %v836 = vunpack.c.l.b16 %v143
    %v837 = vunpack.c.h.b16 %v143
    %v838 = vunpack.c.l.b16 %v144
    %v839 = vunpack.c.h.b16 %v144
    %v840 = vunpack.c.l.b16 %v145
    %v841 = vunpack.c.h.b16 %v145
    %v842 = vunpack.c.l.b16 %v146
    %v843 = vunpack.c.h.b16 %v146
    %v844 = vunpack.c.l.b16 %v147
    %v845 = vunpack.c.h.b16 %v147
    %v846 = vunpack.c.l.b16 %v148
    %v847 = vunpack.c.h.b16 %v148
    %v848 = vunpack.c.l.b16 %v149
    %v849 = vunpack.c.h.b16 %v149
    %v850 = vunpack.c.l.b16 %v150
    %v851 = vunpack.c.h.b16 %v150
    %v852 = vunpack.c.l.b16 %v151
    %v853 = vunpack.c.h.b16 %v151
    %v854 = vunpack.c.l.b16 %v152
    %v855 = vunpack.c.h.b16 %v152
    %v856 = vunpack.c.l.b16 %v153
    %v857 = vunpack.c.h.b16 %v153
    %v858 = vunpack.c.l.b16 %v154
    %v859 = vunpack.c.h.b16 %v154
    %v860 = vunpack.c.l.b16 %v155
    %v861 = vunpack.c.h.b16 %v155
    %v862 = vunpack.c.l.b16 %v156
    %v863 = vunpack.c.h.b16 %v156
    %v864 = vunpack.c.l.b16 %v157
    %v865 = vunpack.c.h.b16 %v157
    %v866 = vunpack.c.l.b16 %v158
    %v867 = vunpack.c.h.b16 %v158
    %v868 = vunpack.c.l.b16 %v159
    %v869 = vunpack.c.h.b16 %v159
    %v870 = vunpack.c.l.b16 %v160
    %v871 = vunpack.c.h.b16 %v160
    %v872 = vunpack.c.l.b16 %v161
    %v873 = vunpack.c.h.b16 %v161
    %v874 = vunpack.c.l.b16 %v162
    %v875 = vunpack.c.h.b16 %v162
    %v876 = vunpack.c.l.b16 %v163
    %v877 = vunpack.c.h.b16 %v163
    %v878 = vunpack.c.l.b16 %v164
    %v879 = vunpack.c.h.b16 %v164
    %v880 = vunpack.c.l.b16 %v165
    %v881 = vunpack.c.h.b16 %v165
    %v882 = vunpack.c.l.b16 %v166
    %v883 = vunpack.c.h.b16 %v166
    %v884 = vunpack.c.l.b16 %v167
    %v885 = vunpack.c.h.b16 %v167
    %v886 = vunpack.c.l.b16 %v168
    %v887 = vunpack.c.h.b16 %v168
    %v888 = vunpack.c.l.b16 %v169
    %v889 = vunpack.c.h.b16 %v169
    %v890 = vunpack.c.l.b16 %v170
    %v891 = vunpack.c.h.b16 %v170
    %v892 = vunpack.c.l.b16 %v171
    %v893 = vunpack.c.h.b16 %v171
    %v894 = vunpack.c.l.b16 %v172
    %v895 = vunpack.c.h.b16 %v172
    %v896 = vunpack.c.l.b16 %v173
    %v897 = vunpack.c.h.b16 %v173
    %v898 = vunpack.c.l.b16 %v174
    %v899 = vunpack.c.h.b16 %v174
    %v900 = vunpack.c.l.b16 %v175
    %v901 = vunpack.c.h.b16 %v175
    %v902 = vunpack.c.l.b16 %v176
    %v903 = vunpack.c.h.b16 %v176
    %v904 = vunpack.c.l.b16 %v177
    %v905 = vunpack.c.h.b16 %v177
    %v906 = vunpack.c.l.b16 %v178
    %v907 = vunpack.c.h.b16 %v178
    %v908 = vunpack.c.l.b16 %v179
    %v909 = vunpack.c.h.b16 %v179
    %v910 = vunpack.c.l.b16 %v180
    %v911 = vunpack.c.h.b16 %v180
    %v912 = vunpack.c.l.b16 %v181
    %v913 = vunpack.c.h.b16 %v181
    %v914 = vunpack.c.l.b16 %v182
    %v915 = vunpack.c.h.b16 %v182
    %v916 = vunpack.c.l.b16 %v183
    %v917 = vunpack.c.h.b16 %v183
    %v918 = vunpack.c.l.b16 %v184
    %v919 = vunpack.c.h.b16 %v184
    %v920 = vunpack.c.l.b16 %v185
    %v921 = vunpack.c.h.b16 %v185
    %v922 = vunpack.c.l.b16 %v186
    %v923 = vunpack.c.h.b16 %v186
    %v924 = vunpack.c.l.b16 %v187
    %v925 = vunpack.c.h.b16 %v187
    %v926 = vunpack.c.l.b16 %v188
    %v927 = vunpack.c.h.b16 %v188
    %v928 = vunpack.c.l.b16 %v189
    %v929 = vunpack.c.h.b16 %v189
    %v930 = vunpack.c.l.b16 %v190
    %v931 = vunpack.c.h.b16 %v190
    %v932 = vunpack.c.l.b16 %v191
    %v933 = vunpack.c.h.b16 %v191
    %v934 = vunpack.c.l.b16 %v192
    %v935 = vunpack.c.h.b16 %v192
    %v936 = vunpack.c.l.b16 %v193
    %v937 = vunpack.c.h.b16 %v193
    %v938 = vunpack.c.l.b16 %v194
    %v939 = vunpack.c.h.b16 %v194
    %v940 = vunpack.c.l.b16 %v195
    %v941 = vunpack.c.h.b16 %v195
    %v942 = vunpack.c.l.b16 %v196
    %v943 = vunpack.c.h.b16 %v196
    %v944 = vunpack.c.l.b16 %v197
    %v945 = vunpack.c.h.b16 %v197
    %v946 = vunpack.c.l.b16 %v198
    %v947 = vunpack.c.h.b16 %v198
    %v948 = vunpack.c.l.b16 %v199
    %v949 = vunpack.c.h.b16 %v199
    %v950 = vunpack.c.l.b16 %v200
    %v951 = vunpack.c.h.b16 %v200
    %v952 = vunpack.c.l.b16 %v201
    %v953 = vunpack.c.h.b16 %v201
    %v954 = vunpack.c.l.b16 %v202
    %v955 = vunpack.c.h.b16 %v202
    %v956 = vunpack.c.l.b16 %v203
    %v957 = vunpack.c.h.b16 %v203
    %v958 = vunpack.c.l.b16 %v204
    %v959 = vunpack.c.h.b16 %v204
    %v960 = vunpack.c.l.b16 %v205
    %v961 = vunpack.c.h.b16 %v205
    %v962 = vunpack.c.l.b16 %v206
    %v963 = vunpack.c.h.b16 %v206
    %v964 = vunpack.c.l.b16 %v207
    %v965 = vunpack.c.h.b16 %v207
    %v966 = vunpack.c.l.b16 %v208
    %v967 = vunpack.c.h.b16 %v208
    %v968 = vunpack.c.l.b16 %v209
    %v969 = vunpack.c.h.b16 %v209
    %v970 = vunpack.c.l.b16 %v210
    %v971 = vunpack.c.h.b16 %v210
    %v972 = vunpack.c.l.b16 %v211
    %v973 = vunpack.c.h.b16 %v211
    %v974 = vunpack.c.l.b16 %v212
    %v975 = vunpack.c.h.b16 %v212
    %v976 = vunpack.c.l.b16 %v213
    %v977 = vunpack.c.h.b16 %v213
    %v978 = vunpack.c.l.b16 %v214
    %v979 = vunpack.c.h.b16 %v214
    %v980 = vunpack.c.l.b16 %v215
    %v981 = vunpack.c.h.b16 %v215
    %v982 = vunpack.c.l.b16 %v216
    %v983 = vunpack.c.h.b16 %v216
    %v984 = vunpack.c.l.b16 %v217
    %v985 = vunpack.c.h.b16 %v217
    %v986 = vunpack.c.l.b16 %v218
    %v987 = vunpack.c.h.b16 %v218
    %v988 = vunpack.c.l.b16 %v219
    %v989 = vunpack.c.h.b16 %v219
    %v990 = vunpack.c.l.b16 %v220
    %v991 = vunpack.c.h.b16 %v220
    %v992 = vunpack.c.l.b16 %v221
    %v993 = vunpack.c.h.b16 %v221
    %v994 = vunpack.c.l.b16 %v222
    %v995 = vunpack.c.h.b16 %v222
    %v996 = vunpack.c.l.b16 %v223
    %v997 = vunpack.c.h.b16 %v223
    %v998 = vunpack.c.l.b16 %v224
    %v999 = vunpack.c.h.b16 %v224
    %v1000 = vunpack.c.l.b16 %v225
    %v1001 = vunpack.c.h.b16 %v225
    %v1002 = vunpack.c.l.b16 %v226
    %v1003 = vunpack.c.h.b16 %v226
    %v1004 = vunpack.c.l.b16 %v227
    %v1005 = vunpack.c.h.b16 %v227
    %v1006 = vunpack.c.l.b16 %v228
    %v1007 = vunpack.c.h.b16 %v228
    %v1008 = vunpack.c.l.b16 %v229
    %v1009 = vunpack.c.h.b16 %v229
    %v1010 = vunpack.c.l.b16 %v230
    %v1011 = vunpack.c.h.b16 %v230
    %v1012 = vunpack.c.l.b16 %v231
    %v1013 = vunpack.c.h.b16 %v231
    %v1014 = vunpack.c.l.b16 %v232
    %v1015 = vunpack.c.h.b16 %v232
    %v1016 = vunpack.c.l.b16 %v233
    %v1017 = vunpack.c.h.b16 %v233
    %v1018 = vunpack.c.l.b16 %v234
    %v1019 = vunpack.c.h.b16 %v234
    %v1020 = vunpack.c.l.b16 %v235
    %v1021 = vunpack.c.h.b16 %v235
    %v1022 = vunpack.c.l.b16 %v236
    %v1023 = vunpack.c.h.b16 %v236
    %v1024 = vunpack.c.l.b16 %v237
    %v1025 = vunpack.c.h.b16 %v237
    %v1026 = vunpack.c.l.b16 %v238
    %v1027 = vunpack.c.h.b16 %v238
    %v1028 = vunpack.c.l.b16 %v239
    %v1029 = vunpack.c.h.b16 %v239
    %v1030 = vunpack.c.l.b16 %v240
    %v1031 = vunpack.c.h.b16 %v240
    %v1032 = vunpack.c.l.b16 %v241
    %v1033 = vunpack.c.h.b16 %v241
    %v1034 = vunpack.c.l.b16 %v242
    %v1035 = vunpack.c.h.b16 %v242
    %v1036 = vunpack.c.l.b16 %v243
    %v1037 = vunpack.c.h.b16 %v243
    %v1038 = vunpack.c.l.b16 %v244
    %v1039 = vunpack.c.h.b16 %v244
    %v1040 = vunpack.c.l.b16 %v245
    %v1041 = vunpack.c.h.b16 %v245
    %v1042 = vunpack.c.l.b16 %v246
    %v1043 = vunpack.c.h.b16 %v246
    %v1044 = vunpack.c.l.b16 %v247
    %v1045 = vunpack.c.h.b16 %v247
    %v1046 = vunpack.c.l.b16 %v248
    %v1047 = vunpack.c.h.b16 %v248
    %v1048 = vunpack.c.l.b16 %v249
    %v1049 = vunpack.c.h.b16 %v249
    %v1050 = vunpack.c.l.b16 %v250
    %v1051 = vunpack.c.h.b16 %v250
    %v1052 = vunpack.c.l.b16 %v251
    %v1053 = vunpack.c.h.b16 %v251
    %v1054 = vunpack.c.l.b16 %v252
    %v1055 = vunpack.c.h.b16 %v252
    %v1056 = vunpack.c.l.b16 %v253
    %v1057 = vunpack.c.h.b16 %v253
    %v1058 = vunpack.c.l.b16 %v254
    %v1059 = vunpack.c.h.b16 %v254
    %v1060 = vunpack.c.l.b16 %v255
    %v1061 = vunpack.c.h.b16 %v255
    %v1062 = vunpack.c.l.b16 %v256
    %v1063 = vunpack.c.h.b16 %v256
    %v1064 = vunpack.c.l.b16 %v257
    %v1065 = vunpack.c.h.b16 %v257
    %v1066 = vunpack.c.l.b16 %v258
    %v1067 = vunpack.c.h.b16 %v258
    %v1068 = vunpack.c.l.b16 %v259
    %v1069 = vunpack.c.h.b16 %v259
    %v1070 = vunpack.c.l.b16 %v260
    %v1071 = vunpack.c.h.b16 %v260
    %v1072 = vunpack.c.l.b16 %v261
    %v1073 = vunpack.c.h.b16 %v261
    %v1074 = vunpack.c.l.b16 %v262
    %v1075 = vunpack.c.h.b16 %v262
    %v1076 = vunpack.c.l.b16 %v263
    %v1077 = vunpack.c.h.b16 %v263
    %v1078 = vunpack.c.l.b16 %v264
    %v1079 = vunpack.c.h.b16 %v264
    %v1080 = vunpack.c.l.b16 %v265
    %v1081 = vunpack.c.h.b16 %v265
    %v1082 = vunpack.c.l.b16 %v266
    %v1083 = vunpack.c.h.b16 %v266
    %v1084 = vunpack.c.l.b16 %v267
    %v1085 = vunpack.c.h.b16 %v267
    %v1086 = vunpack.c.l.b16 %v268
    %v1087 = vunpack.c.h.b16 %v268
    %v1088 = vunpack.c.l.b16 %v269
    %v1089 = vunpack.c.h.b16 %v269
    %v1090 = vunpack.c.l.b16 %v270
    %v1091 = vunpack.c.h.b16 %v270
    %v1092 = vunpack.c.l.b16 %v271
    %v1093 = vunpack.c.h.b16 %v271
    %v1094 = vunpack.c.l.b16 %v272
    %v1095 = vunpack.c.h.b16 %v272
    %v1096 = vunpack.c.l.b16 %v273
    %v1097 = vunpack.c.h.b16 %v273
    %v1098 = vunpack.c.l.b16 %v274
    %v1099 = vunpack.c.h.b16 %v274
    %v1100 = vunpack.c.l.b16 %v275
    %v1101 = vunpack.c.h.b16 %v275
    %v1102 = vunpack.c.l.b16 %v276
    %v1103 = vunpack.c.h.b16 %v276
    %v1104 = vunpack.c.l.b16 %v277
    %v1105 = vunpack.c.h.b16 %v277
    %v1106 = vunpack.c.l.b16 %v278
    %v1107 = vunpack.c.h.b16 %v278
    %v1108 = vunpack.c.l.b16 %v279
    %v1109 = vunpack.c.h.b16 %v279
    %v1110 = vunpack.c.l.b16 %v280
    %v1111 = vunpack.c.h.b16 %v280
    %v1112 = vunpack.c.l.b16 %v281
    %v1113 = vunpack.c.h.b16 %v281
    %v1114 = vpack.c.b16 %v606, %v602
    %v1115 = vpack.c.b16 %v607, %v603
    %v1116 = vpack.c.b16 %v608, %v604
    %v1117 = vpack.c.b16 %v609, %v605
    %v1118 = vpack.c.b16 %v614, %v610
    %v1119 = vpack.c.b16 %v615, %v611
    %v1120 = vpack.c.b16 %v616, %v612
    %v1121 = vpack.c.b16 %v617, %v613
    %v1122 = vpack.c.b16 %v622, %v618
    %v1123 = vpack.c.b16 %v623, %v619
    %v1124 = vpack.c.b16 %v624, %v620
    %v1125 = vpack.c.b16 %v625, %v621
    %v1126 = vpack.c.b16 %v630, %v626
    %v1127 = vpack.c.b16 %v631, %v627
    %v1128 = vpack.c.b16 %v632, %v628
    %v1129 = vpack.c.b16 %v633, %v629
    %v1130 = vpack.c.b16 %v638, %v634
    %v1131 = vpack.c.b16 %v639, %v635
    %v1132 = vpack.c.b16 %v640, %v636
    %v1133 = vpack.c.b16 %v641, %v637
    %v1134 = vpack.c.b16 %v646, %v642
    %v1135 = vpack.c.b16 %v647, %v643
    %v1136 = vpack.c.b16 %v648, %v644
    %v1137 = vpack.c.b16 %v649, %v645
    %v1138 = vpack.c.b16 %v654, %v650
    %v1139 = vpack.c.b16 %v655, %v651
    %v1140 = vpack.c.b16 %v656, %v652
    %v1141 = vpack.c.b16 %v657, %v653
    %v1142 = vpack.c.b16 %v662, %v658
    %v1143 = vpack.c.b16 %v663, %v659
    %v1144 = vpack.c.b16 %v664, %v660
    %v1145 = vpack.c.b16 %v665, %v661
    %v1146 = vpack.c.b16 %v670, %v666
    %v1147 = vpack.c.b16 %v671, %v667
    %v1148 = vpack.c.b16 %v672, %v668
    %v1149 = vpack.c.b16 %v673, %v669
    %v1150 = vpack.c.b16 %v678, %v674
    %v1151 = vpack.c.b16 %v679, %v675
    %v1152 = vpack.c.b16 %v680, %v676
    %v1153 = vpack.c.b16 %v681, %v677
    %v1154 = vpack.c.b16 %v686, %v682
    %v1155 = vpack.c.b16 %v687, %v683
    %v1156 = vpack.c.b16 %v688, %v684
    %v1157 = vpack.c.b16 %v689, %v685
    %v1158 = vpack.c.b16 %v694, %v690
    %v1159 = vpack.c.b16 %v695, %v691
    %v1160 = vpack.c.b16 %v696, %v692
    %v1161 = vpack.c.b16 %v697, %v693
    %v1162 = vpack.c.b16 %v702, %v698
    %v1163 = vpack.c.b16 %v703, %v699
    %v1164 = vpack.c.b16 %v704, %v700
    %v1165 = vpack.c.b16 %v705, %v701
    %v1166 = vpack.c.b16 %v710, %v706
    %v1167 = vpack.c.b16 %v711, %v707
    %v1168 = vpack.c.b16 %v712, %v708
    %v1169 = vpack.c.b16 %v713, %v709
    %v1170 = vpack.c.b16 %v718, %v714
    %v1171 = vpack.c.b16 %v719, %v715
    %v1172 = vpack.c.b16 %v720, %v716
    %v1173 = vpack.c.b16 %v721, %v717
    %v1174 = vpack.c.b16 %v726, %v722
    %v1175 = vpack.c.b16 %v727, %v723
    %v1176 = vpack.c.b16 %v728, %v724
    %v1177 = vpack.c.b16 %v729, %v725
    %v1178 = vpack.c.b16 %v734, %v730
    %v1179 = vpack.c.b16 %v735, %v731
    %v1180 = vpack.c.b16 %v736, %v732
    %v1181 = vpack.c.b16 %v737, %v733
    %v1182 = vpack.c.b16 %v742, %v738
    %v1183 = vpack.c.b16 %v743, %v739
    %v1184 = vpack.c.b16 %v744, %v740
    %v1185 = vpack.c.b16 %v745, %v741
    %v1186 = vpack.c.b16 %v750, %v746
    %v1187 = vpack.c.b16 %v751, %v747
    %v1188 = vpack.c.b16 %v752, %v748
    %v1189 = vpack.c.b16 %v753, %v749
    %v1190 = vpack.c.b16 %v758, %v754
    %v1191 = vpack.c.b16 %v759, %v755
    %v1192 = vpack.c.b16 %v760, %v756
    %v1193 = vpack.c.b16 %v761, %v757
    %v1194 = vpack.c.b16 %v766, %v762
    %v1195 = vpack.c.b16 %v767, %v763
    %v1196 = vpack.c.b16 %v768, %v764
    %v1197 = vpack.c.b16 %v769, %v765
    %v1198 = vpack.c.b16 %v774, %v770
    %v1199 = vpack.c.b16 %v775, %v771
    %v1200 = vpack.c.b16 %v776, %v772
    %v1201 = vpack.c.b16 %v777, %v773
    %v1202 = vpack.c.b16 %v782, %v778
    %v1203 = vpack.c.b16 %v783, %v779
    %v1204 = vpack.c.b16 %v784, %v780
    %v1205 = vpack.c.b16 %v785, %v781
    %v1206 = vpack.c.b16 %v790, %v786
    %v1207 = vpack.c.b16 %v791, %v787
    %v1208 = vpack.c.b16 %v792, %v788
    %v1209 = vpack.c.b16 %v793, %v789
    %v1210 = vpack.c.b16 %v798, %v794
    %v1211 = vpack.c.b16 %v799, %v795
    %v1212 = vpack.c.b16 %v800, %v796
    %v1213 = vpack.c.b16 %v801, %v797
    %v1214 = vpack.c.b16 %v806, %v802
    %v1215 = vpack.c.b16 %v807, %v803
    %v1216 = vpack.c.b16 %v808, %v804
    %v1217 = vpack.c.b16 %v809, %v805
    %v1218 = vpack.c.b16 %v814, %v810
    %v1219 = vpack.c.b16 %v815, %v811
    %v1220 = vpack.c.b16 %v816, %v812
    %v1221 = vpack.c.b16 %v817, %v813
    %v1222 = vpack.c.b16 %v822, %v818
    %v1223 = vpack.c.b16 %v823, %v819
    %v1224 = vpack.c.b16 %v824, %v820
    %v1225 = vpack.c.b16 %v825, %v821
    %v1226 = vpack.c.b16 %v830, %v826
    %v1227 = vpack.c.b16 %v831, %v827
    %v1228 = vpack.c.b16 %v832, %v828
    %v1229 = vpack.c.b16 %v833, %v829
    %v1230 = vpack.c.b16 %v838, %v834
    %v1231 = vpack.c.b16 %v839, %v835
    %v1232 = vpack.c.b16 %v840, %v836
    %v1233 = vpack.c.b16 %v841, %v837
    %v1234 = vpack.c.b16 %v846, %v842
    %v1235 = vpack.c.b16 %v847, %v843
    %v1236 = vpack.c.b16 %v848, %v844
    %v1237 = vpack.c.b16 %v849, %v845
    %v1238 = vpack.c.b16 %v854, %v850
    %v1239 = vpack.c.b16 %v855, %v851
    %v1240 = vpack.c.b16 %v856, %v852
    %v1241 = vpack.c.b16 %v857, %v853
    %v1242 = vpack.c.b16 %v862, %v858
    %v1243 = vpack.c.b16 %v863, %v859
    %v1244 = vpack.c.b16 %v864, %v860
    %v1245 = vpack.c.b16 %v865, %v861
    %v1246 = vpack.c.b16 %v870, %v866
    %v1247 = vpack.c.b16 %v871, %v867
    %v1248 = vpack.c.b16 %v872, %v868
    %v1249 = vpack.c.b16 %v873, %v869
    %v1250 = vpack.c.b16 %v878, %v874
    %v1251 = vpack.c.b16 %v879, %v875
    %v1252 = vpack.c.b16 %v880, %v876
    %v1253 = vpack.c.b16 %v881, %v877
    %v1254 = vpack.c.b16 %v886, %v882
    %v1255 = vpack.c.b16 %v887, %v883
    %v1256 = vpack.c.b16 %v888, %v884
    %v1257 = vpack.c.b16 %v889, %v885
    %v1258 = vpack.c.b16 %v894, %v890
    %v1259 = vpack.c.b16 %v895, %v891
    %v1260 = vpack.c.b16 %v896, %v892
    %v1261 = vpack.c.b16 %v897, %v893
    %v1262 = vpack.c.b16 %v902, %v898
    %v1263 = vpack.c.b16 %v903, %v899
    %v1264 = vpack.c.b16 %v904, %v900
    %v1265 = vpack.c.b16 %v905, %v901
    %v1266 = vpack.c.b16 %v910, %v906
    %v1267 = vpack.c.b16 %v911, %v907
    %v1268 = vpack.c.b16 %v912, %v908
    %v1269 = vpack.c.b16 %v913, %v909
    %v1270 = vpack.c.b16 %v918, %v914
    %v1271 = vpack.c.b16 %v919, %v915
    %v1272 = vpack.c.b16 %v920, %v916
    %v1273 = vpack.c.b16 %v921, %v917
    %v1274 = vpack.c.b16 %v926, %v922
    %v1275 = vpack.c.b16 %v927, %v923
    %v1276 = vpack.c.b16 %v928, %v924
    %v1277 = vpack.c.b16 %v929, %v925
    %v1278 = vpack.c.b16 %v934, %v930
    %v1279 = vpack.c.b16 %v935, %v931
    %v1280 = vpack.c.b16 %v936, %v932
    %v1281 = vpack.c.b16 %v937, %v933
    %v1282 = vpack.c.b16 %v942, %v938
    %v1283 = vpack.c.b16 %v943, %v939
    %v1284 = vpack.c.b16 %v944, %v940
    %v1285 = vpack.c.b16 %v945, %v941
    %v1286 = vpack.c.b16 %v950, %v946
    %v1287 = vpack.c.b16 %v951, %v947
    %v1288 = vpack.c.b16 %v952, %v948
    %v1289 = vpack.c.b16 %v953, %v949
    %v1290 = vpack.c.b16 %v958, %v954
    %v1291 = vpack.c.b16 %v959, %v955
    %v1292 = vpack.c.b16 %v960, %v956
    %v1293 = vpack.c.b16 %v961, %v957
    %v1294 = vpack.c.b16 %v966, %v962
    %v1295 = vpack.c.b16 %v967, %v963
    %v1296 = vpack.c.b16 %v968, %v964
    %v1297 = vpack.c.b16 %v969, %v965
    %v1298 = vpack.c.b16 %v974, %v970
    %v1299 = vpack.c.b16 %v975, %v971
    %v1300 = vpack.c.b16 %v976, %v972
    %v1301 = vpack.c.b16 %v977, %v973
    %v1302 = vpack.c.b16 %v982, %v978
    %v1303 = vpack.c.b16 %v983, %v979
    %v1304 = vpack.c.b16 %v984, %v980
    %v1305 = vpack.c.b16 %v985, %v981
    %v1306 = vpack.c.b16 %v990, %v986
    %v1307 = vpack.c.b16 %v991, %v987
    %v1308 = vpack.c.b16 %v992, %v988
    %v1309 = vpack.c.b16 %v993, %v989
    %v1310 = vpack.c.b16 %v998, %v994
    %v1311 = vpack.c.b16 %v999, %v995
    %v1312 = vpack.c.b16 %v1000, %v996
    %v1313 = vpack.c.b16 %v1001, %v997
    %v1314 = vpack.c.b16 %v1006, %v1002
    %v1315 = vpack.c.b16 %v1007, %v1003
    %v1316 = vpack.c.b16 %v1008, %v1004
    %v1317 = vpack.c.b16 %v1009, %v1005
    %v1318 = vpack.c.b16 %v1014, %v1010
    %v1319 = vpack.c.b16 %v1015, %v1011
    %v1320 = vpack.c.b16 %v1016, %v1012
    %v1321 = vpack.c.b16 %v1017, %v1013
    %v1322 = vpack.c.b16 %v1022, %v1018
    %v1323 = vpack.c.b16 %v1023, %v1019
    %v1324 = vpack.c.b16 %v1024, %v1020
    %v1325 = vpack.c.b16 %v1025, %v1021
    %v1326 = vpack.c.b16 %v1030, %v1026
    %v1327 = vpack.c.b16 %v1031, %v1027
    %v1328 = vpack.c.b16 %v1032, %v1028
    %v1329 = vpack.c.b16 %v1033, %v1029
    %v1330 = vpack.c.b16 %v1038, %v1034
    %v1331 = vpack.c.b16 %v1039, %v1035
    %v1332 = vpack.c.b16 %v1040, %v1036
    %v1333 = vpack.c.b16 %v1041, %v1037
    %v1334 = vpack.c.b16 %v1046, %v1042
    %v1335 = vpack.c.b16 %v1047, %v1043
    %v1336 = vpack.c.b16 %v1048, %v1044
    %v1337 = vpack.c.b16 %v1049, %v1045
    %v1338 = vpack.c.b16 %v1054, %v1050
    %v1339 = vpack.c.b16 %v1055, %v1051
    %v1340 = vpack.c.b16 %v1056, %v1052
    %v1341 = vpack.c.b16 %v1057, %v1053
    %v1342 = vpack.c.b16 %v1062, %v1058
    %v1343 = vpack.c.b16 %v1063, %v1059
    %v1344 = vpack.c.b16 %v1064, %v1060
    %v1345 = vpack.c.b16 %v1065, %v1061
    %v1346 = vpack.c.b16 %v1070, %v1066
    %v1347 = vpack.c.b16 %v1071, %v1067
    %v1348 = vpack.c.b16 %v1072, %v1068
    %v1349 = vpack.c.b16 %v1073, %v1069
    %v1350 = vpack.c.b16 %v1078, %v1074
    %v1351 = vpack.c.b16 %v1079, %v1075
    %v1352 = vpack.c.b16 %v1080, %v1076
    %v1353 = vpack.c.b16 %v1081, %v1077
    %v1354 = vpack.c.b16 %v1086, %v1082
    %v1355 = vpack.c.b16 %v1087, %v1083
    %v1356 = vpack.c.b16 %v1088, %v1084
    %v1357 = vpack.c.b16 %v1089, %v1085
    %v1358 = vpack.c.b16 %v1094, %v1090
    %v1359 = vpack.c.b16 %v1095, %v1091
    %v1360 = vpack.c.b16 %v1096, %v1092
    %v1361 = vpack.c.b16 %v1097, %v1093
    %v1362 = vpack.c.b16 %v1102, %v1098
    %v1363 = vpack.c.b16 %v1103, %v1099
    %v1364 = vpack.c.b16 %v1104, %v1100
    %v1365 = vpack.c.b16 %v1105, %v1101
    %v1366 = vpack.c.b16 %v1110, %v1106
    %v1367 = vpack.c.b16 %v1111, %v1107
    %v1368 = vpack.c.b16 %v1112, %v1108
    %v1369 = vpack.c.b16 %v1113, %v1109
    %v1690 = vunpack.c.l.b16 %v282
    %v1691 = vunpack.c.l.b16 %v283
    %v1692 = vunpack.c.l.b16 %v284
    %v1693 = vunpack.c.l.b16 %v285
    %v1694 = vunpack.c.l.b16 %v286
    %v1695 = vunpack.c.l.b16 %v287
    %v1696 = vunpack.c.l.b16 %v288
    %v1697 = vunpack.c.l.b16 %v289
    %v1698 = vunpack.c.l.b16 %v290
    %v1699 = vunpack.c.l.b16 %v291
    %v1700 = vunpack.c.l.b16 %v292
    %v1701 = vunpack.c.l.b16 %v293
    %v1702 = vunpack.c.l.b16 %v294
    %v1703 = vunpack.c.l.b16 %v295
    %v1704 = vunpack.c.l.b16 %v296
    %v1705 = vunpack.c.l.b16 %v297
    %v1706 = vunpack.c.l.b16 %v298
    %v1707 = vunpack.c.l.b16 %v299
    %v1708 = vunpack.c.l.b16 %v300
    %v1709 = vunpack.c.l.b16 %v301
    %v1710 = vunpack.c.l.b16 %v302
    %v1711 = vunpack.c.l.b16 %v303
    %v1712 = vunpack.c.l.b16 %v304
    %v1713 = vunpack.c.l.b16 %v305
    %v1714 = vunpack.c.l.b16 %v306
    %v1715 = vunpack.c.l.b16 %v307
    %v1716 = vunpack.c.l.b16 %v308
    %v1717 = vunpack.c.l.b16 %v309
    %v1718 = vunpack.c.l.b16 %v310
    %v1719 = vunpack.c.l.b16 %v311
    %v1720 = vunpack.c.l.b16 %v312
    %v1721 = vunpack.c.l.b16 %v313
    %v1722 = vunpack.c.l.b16 %v314
    %v1723 = vunpack.c.l.b16 %v315
    %v1724 = vunpack.c.l.b16 %v316
    %v1725 = vunpack.c.l.b16 %v317
    %v1726 = vunpack.c.l.b16 %v318
    %v1727 = vunpack.c.l.b16 %v319
    %v1728 = vunpack.c.l.b16 %v320
    %v1729 = vunpack.c.l.b16 %v321
    %v1730 = vunpack.c.l.b16 %v322
    %v1731 = vunpack.c.l.b16 %v323
    %v1732 = vunpack.c.l.b16 %v324
    %v1733 = vunpack.c.l.b16 %v325
    %v1734 = vunpack.c.l.b16 %v326
    %v1735 = vunpack.c.l.b16 %v327
    %v1736 = vunpack.c.l.b16 %v328
    %v1737 = vunpack.c.l.b16 %v329
    %v1738 = vunpack.c.l.b16 %v330
    %v1739 = vunpack.c.l.b16 %v331
    %v1740 = vunpack.c.l.b16 %v332
    %v1741 = vunpack.c.l.b16 %v333
    %v1742 = vunpack.c.l.b16 %v334
    %v1743 = vunpack.c.l.b16 %v335
    %v1744 = vunpack.c.l.b16 %v336
    %v1745 = vunpack.c.l.b16 %v337
    %v1746 = vunpack.c.l.b16 %v338
    %v1747 = vunpack.c.l.b16 %v339
    %v1748 = vunpack.c.l.b16 %v340
    %v1749 = vunpack.c.l.b16 %v341
    %v1750 = vunpack.c.l.b16 %v342
    %v1751 = vunpack.c.l.b16 %v343
    %v1752 = vunpack.c.l.b16 %v344
    %v1753 = vunpack.c.l.b16 %v345
    %v1754 = vpack.c.b16 %v1691, %v1690
    %v1755 = vpack.c.b16 %v1693, %v1692
    %v1756 = vpack.c.b16 %v1695, %v1694
    %v1757 = vpack.c.b16 %v1697, %v1696
    %v1758 = vpack.c.b16 %v1699, %v1698
    %v1759 = vpack.c.b16 %v1701, %v1700
    %v1760 = vpack.c.b16 %v1703, %v1702
    %v1761 = vpack.c.b16 %v1705, %v1704
    %v1762 = vpack.c.b16 %v1707, %v1706
    %v1763 = vpack.c.b16 %v1709, %v1708
    %v1764 = vpack.c.b16 %v1711, %v1710
    %v1765 = vpack.c.b16 %v1713, %v1712
    %v1766 = vpack.c.b16 %v1715, %v1714
    %v1767 = vpack.c.b16 %v1717, %v1716
    %v1768 = vpack.c.b16 %v1719, %v1718
    %v1769 = vpack.c.b16 %v1721, %v1720
    %v1770 = vpack.c.b16 %v1723, %v1722
    %v1771 = vpack.c.b16 %v1725, %v1724
    %v1772 = vpack.c.b16 %v1727, %v1726
    %v1773 = vpack.c.b16 %v1729, %v1728
    %v1774 = vpack.c.b16 %v1731, %v1730
    %v1775 = vpack.c.b16 %v1733, %v1732
    %v1776 = vpack.c.b16 %v1735, %v1734
    %v1777 = vpack.c.b16 %v1737, %v1736
    %v1778 = vpack.c.b16 %v1739, %v1738
    %v1779 = vpack.c.b16 %v1741, %v1740
    %v1780 = vpack.c.b16 %v1743, %v1742
    %v1781 = vpack.c.b16 %v1745, %v1744
    %v1782 = vpack.c.b16 %v1747, %v1746
    %v1783 = vpack.c.b16 %v1749, %v1748
    %v1784 = vpack.c.b16 %v1751, %v1750
    %v1785 = vpack.c.b16 %v1753, %v1752
    %1818 = vmatprep.subr.bf16.mxu0 0
    %1819 = vmatpush1.bf16.msra.mxu0 %v1761
    %1820 = vmatprep.subr.bf16.mxu0 0
    %1821 = vmatpush1.bf16.msra.mxu0 %v1760
    %1822 = vmatprep.subr.bf16.mxu0 0
    %1823 = vmatpush1.bf16.msra.mxu0 %v1759
    %1824 = vmatprep.subr.bf16.mxu0 0
    %1825 = vmatpush1.bf16.msra.mxu0 %v1758
    %1826 = vmatprep.subr.bf16.mxu0 0
    %1827 = vmatpush1.bf16.msra.mxu0 %v1757
    %1828 = vmatprep.subr.bf16.mxu0 0
    %1829 = vmatpush1.bf16.msra.mxu0 %v1756
    %1830 = vmatprep.subr.bf16.mxu0 0
    %1831 = vmatpush1.bf16.msra.mxu0 %v1755
    %1832 = vmatprep.subr.bf16.mxu0 0
    %1833 = vmatpush1.bf16.msra.mxu0 %v1754
    %1834 = vmatprep.subr.bf16.mxu0 0
    %1835 = vmatpush2.bf16.msra.mxu0 %v1769
    %1836 = vmatprep.subr.bf16.mxu0 0
    %1837 = vmatpush2.bf16.msra.mxu0 %v1768
    %1838 = vmatprep.subr.bf16.mxu0 0
    %1839 = vmatpush2.bf16.msra.mxu0 %v1767
    %1840 = vmatprep.subr.bf16.mxu0 0
    %1841 = vmatpush2.bf16.msra.mxu0 %v1766
    %1842 = vmatprep.subr.bf16.mxu0 0
    %1843 = vmatpush2.bf16.msra.mxu0 %v1765
    %1844 = vmatprep.subr.bf16.mxu0 0
    %1845 = vmatpush2.bf16.msra.mxu0 %v1764
    %1846 = vmatprep.subr.bf16.mxu0 0
    %1847 = vmatpush2.bf16.msra.mxu0 %v1763
    %1848 = vmatprep.subr.bf16.mxu0 0
    %1849 = vmatpush2.bf16.msra.mxu0 %v1762
    %1850 = vmatprep.mubr.bf16.mxu0 %v1115
    %1851 = vmatmul.mubr.bf16.gmra.mxu0 %v1114
    %v1852 = vpop.f32.mrf.mxu0
    %v1853 = vadd.f32 0.0, %v1852
    %v1854 = vpop.f32.mrf.mxu0
    %v1855 = vpop.f32.mrf.mxu0
    %v1856 = vadd.f32 0.0, %v1855
    %v1857 = vpop.f32.mrf.mxu0
    %1858 = vmatprep.mubr.bf16.mxu0 %v1119
    %1859 = vmatmul.mubr.bf16.gmra.mxu0 %v1118
    %v1860 = vpop.f32.mrf.mxu0
    %v1861 = vadd.f32 0.0, %v1860
    %v1862 = vpop.f32.mrf.mxu0
    %v1863 = vpop.f32.mrf.mxu0
    %v1864 = vadd.f32 0.0, %v1863
    %v1865 = vpop.f32.mrf.mxu0
    %1866 = vmatprep.mubr.bf16.mxu0 %v1123
    %1867 = vmatmul.mubr.bf16.gmra.mxu0 %v1122
    %v1868 = vpop.f32.mrf.mxu0
    %v1869 = vadd.f32 0.0, %v1868
    %v1870 = vpop.f32.mrf.mxu0
    %v1871 = vpop.f32.mrf.mxu0
    %v1872 = vadd.f32 0.0, %v1871
    %v1873 = vpop.f32.mrf.mxu0
    %1874 = vmatprep.mubr.bf16.mxu0 %v1127
    %1875 = vmatmul.mubr.bf16.gmra.mxu0 %v1126
    %v1876 = vpop.f32.mrf.mxu0
    %v1877 = vadd.f32 0.0, %v1876
    %v1878 = vpop.f32.mrf.mxu0
    %v1879 = vpop.f32.mrf.mxu0
    %v1880 = vadd.f32 0.0, %v1879
    %v1881 = vpop.f32.mrf.mxu0
    %1882 = vmatprep.mubr.bf16.mxu0 %v1131
    %1883 = vmatmul.mubr.bf16.gmra.mxu0 %v1130
    %v1884 = vpop.f32.mrf.mxu0
    %v1885 = vadd.f32 0.0, %v1884
    %v1886 = vpop.f32.mrf.mxu0
    %v1887 = vpop.f32.mrf.mxu0
    %v1888 = vadd.f32 0.0, %v1887
    %v1889 = vpop.f32.mrf.mxu0
    %1890 = vmatprep.mubr.bf16.mxu0 %v1135
    %1891 = vmatmul.mubr.bf16.gmra.mxu0 %v1134
    %v1892 = vpop.f32.mrf.mxu0
    %v1893 = vadd.f32 0.0, %v1892
    %v1894 = vpop.f32.mrf.mxu0
    %v1895 = vpop.f32.mrf.mxu0
    %v1896 = vadd.f32 0.0, %v1895
    %v1897 = vpop.f32.mrf.mxu0
    %1898 = vmatprep.mubr.bf16.mxu0 %v1139
    %1899 = vmatmul.mubr.bf16.gmra.mxu0 %v1138
    %v1900 = vpop.f32.mrf.mxu0
    %v1901 = vadd.f32 0.0, %v1900
    %v1902 = vpop.f32.mrf.mxu0
    %v1903 = vpop.f32.mrf.mxu0
    %v1904 = vadd.f32 0.0, %v1903
    %v1905 = vpop.f32.mrf.mxu0
    %1906 = vmatprep.mubr.bf16.mxu0 %v1143
    %1907 = vmatmul.mubr.bf16.gmra.mxu0 %v1142
    %v1908 = vpop.f32.mrf.mxu0
    %v1909 = vadd.f32 0.0, %v1908
    %v1910 = vpop.f32.mrf.mxu0
    %v1911 = vpop.f32.mrf.mxu0
    %v1912 = vadd.f32 0.0, %v1911
    %v1913 = vpop.f32.mrf.mxu0
    %1914 = vmatprep.mubr.bf16.mxu0 %v1147
    %1915 = vmatmul.mubr.bf16.gmra.mxu0 %v1146
    %v1916 = vpop.f32.mrf.mxu0
    %v1917 = vadd.f32 0.0, %v1916
    %v1918 = vpop.f32.mrf.mxu0
    %v1919 = vpop.f32.mrf.mxu0
    %v1920 = vadd.f32 0.0, %v1919
    %v1921 = vpop.f32.mrf.mxu0
    %1922 = vmatprep.mubr.bf16.mxu0 %v1151
    %1923 = vmatmul.mubr.bf16.gmra.mxu0 %v1150
    %v1924 = vpop.f32.mrf.mxu0
    %v1925 = vadd.f32 0.0, %v1924
    %v1926 = vpop.f32.mrf.mxu0
    %v1927 = vpop.f32.mrf.mxu0
    %v1928 = vadd.f32 0.0, %v1927
    %v1929 = vpop.f32.mrf.mxu0
    %1930 = vmatprep.mubr.bf16.mxu0 %v1155
    %1931 = vmatmul.mubr.bf16.gmra.mxu0 %v1154
    %v1932 = vpop.f32.mrf.mxu0
    %v1933 = vadd.f32 0.0, %v1932
    %v1934 = vpop.f32.mrf.mxu0
    %v1935 = vpop.f32.mrf.mxu0
    %v1936 = vadd.f32 0.0, %v1935
    %v1937 = vpop.f32.mrf.mxu0
    %1938 = vmatprep.mubr.bf16.mxu0 %v1159
    %1939 = vmatmul.mubr.bf16.gmra.mxu0 %v1158
    %v1940 = vpop.f32.mrf.mxu0
    %v1941 = vadd.f32 0.0, %v1940
    %v1942 = vpop.f32.mrf.mxu0
    %v1943 = vpop.f32.mrf.mxu0
    %v1944 = vadd.f32 0.0, %v1943
    %v1945 = vpop.f32.mrf.mxu0
    %1946 = vmatprep.mubr.bf16.mxu0 %v1163
    %1947 = vmatmul.mubr.bf16.gmra.mxu0 %v1162
    %v1948 = vpop.f32.mrf.mxu0
    %v1949 = vadd.f32 0.0, %v1948
    %v1950 = vpop.f32.mrf.mxu0
    %v1951 = vpop.f32.mrf.mxu0
    %v1952 = vadd.f32 0.0, %v1951
    %v1953 = vpop.f32.mrf.mxu0
    %1954 = vmatprep.mubr.bf16.mxu0 %v1167
    %1955 = vmatmul.mubr.bf16.gmra.mxu0 %v1166
    %v1956 = vpop.f32.mrf.mxu0
    %v1957 = vadd.f32 0.0, %v1956
    %v1958 = vpop.f32.mrf.mxu0
    %v1959 = vpop.f32.mrf.mxu0
    %v1960 = vadd.f32 0.0, %v1959
    %v1961 = vpop.f32.mrf.mxu0
    %1962 = vmatprep.mubr.bf16.mxu0 %v1171
    %1963 = vmatmul.mubr.bf16.gmra.mxu0 %v1170
    %v1964 = vpop.f32.mrf.mxu0
    %v1965 = vadd.f32 0.0, %v1964
    %v1966 = vpop.f32.mrf.mxu0
    %v1967 = vpop.f32.mrf.mxu0
    %v1968 = vadd.f32 0.0, %v1967
    %v1969 = vpop.f32.mrf.mxu0
    %1970 = vmatprep.mubr.bf16.mxu0 %v1175
    %1971 = vmatmul.mubr.bf16.gmra.mxu0 %v1174
    %v1972 = vpop.f32.mrf.mxu0
    %v1973 = vadd.f32 0.0, %v1972
    %v1974 = vpop.f32.mrf.mxu0
    %v1975 = vpop.f32.mrf.mxu0
    %v1976 = vadd.f32 0.0, %v1975
    %v1977 = vpop.f32.mrf.mxu0
    %1978 = vmatprep.mubr.bf16.mxu0 %v1179
    %1979 = vmatmul.mubr.bf16.gmra.mxu0 %v1178
    %v1980 = vpop.f32.mrf.mxu0
    %v1981 = vadd.f32 0.0, %v1980
    %v1982 = vpop.f32.mrf.mxu0
    %v1983 = vpop.f32.mrf.mxu0
    %v1984 = vadd.f32 0.0, %v1983
    %v1985 = vpop.f32.mrf.mxu0
    %1986 = vmatprep.mubr.bf16.mxu0 %v1183
    %1987 = vmatmul.mubr.bf16.gmra.mxu0 %v1182
    %v1988 = vpop.f32.mrf.mxu0
    %v1989 = vadd.f32 0.0, %v1988
    %v1990 = vpop.f32.mrf.mxu0
    %v1991 = vpop.f32.mrf.mxu0
    %v1992 = vadd.f32 0.0, %v1991
    %v1993 = vpop.f32.mrf.mxu0
    %1994 = vmatprep.mubr.bf16.mxu0 %v1187
    %1995 = vmatmul.mubr.bf16.gmra.mxu0 %v1186
    %v1996 = vpop.f32.mrf.mxu0
    %v1997 = vadd.f32 0.0, %v1996
    %v1998 = vpop.f32.mrf.mxu0
    %v1999 = vpop.f32.mrf.mxu0
    %v2000 = vadd.f32 0.0, %v1999
    %v2001 = vpop.f32.mrf.mxu0
    %2002 = vmatprep.mubr.bf16.mxu0 %v1191
    %2003 = vmatmul.mubr.bf16.gmra.mxu0 %v1190
    %v2004 = vpop.f32.mrf.mxu0
    %v2005 = vadd.f32 0.0, %v2004
    %v2006 = vpop.f32.mrf.mxu0
    %v2007 = vpop.f32.mrf.mxu0
    %v2008 = vadd.f32 0.0, %v2007
    %v2009 = vpop.f32.mrf.mxu0
    %2010 = vmatprep.mubr.bf16.mxu0 %v1195
    %2011 = vmatmul.mubr.bf16.gmra.mxu0 %v1194
    %v2012 = vpop.f32.mrf.mxu0
    %v2013 = vadd.f32 0.0, %v2012
    %v2014 = vpop.f32.mrf.mxu0
    %v2015 = vpop.f32.mrf.mxu0
    %v2016 = vadd.f32 0.0, %v2015
    %v2017 = vpop.f32.mrf.mxu0
    %2018 = vmatprep.mubr.bf16.mxu0 %v1199
    %2019 = vmatmul.mubr.bf16.gmra.mxu0 %v1198
    %v2020 = vpop.f32.mrf.mxu0
    %v2021 = vadd.f32 0.0, %v2020
    %v2022 = vpop.f32.mrf.mxu0
    %v2023 = vpop.f32.mrf.mxu0
    %v2024 = vadd.f32 0.0, %v2023
    %v2025 = vpop.f32.mrf.mxu0
    %2026 = vmatprep.mubr.bf16.mxu0 %v1203
    %2027 = vmatmul.mubr.bf16.gmra.mxu0 %v1202
    %v2028 = vpop.f32.mrf.mxu0
    %v2029 = vadd.f32 0.0, %v2028
    %v2030 = vpop.f32.mrf.mxu0
    %v2031 = vpop.f32.mrf.mxu0
    %v2032 = vadd.f32 0.0, %v2031
    %v2033 = vpop.f32.mrf.mxu0
    %2034 = vmatprep.mubr.bf16.mxu0 %v1207
    %2035 = vmatmul.mubr.bf16.gmra.mxu0 %v1206
    %v2036 = vpop.f32.mrf.mxu0
    %v2037 = vadd.f32 0.0, %v2036
    %v2038 = vpop.f32.mrf.mxu0
    %v2039 = vpop.f32.mrf.mxu0
    %v2040 = vadd.f32 0.0, %v2039
    %v2041 = vpop.f32.mrf.mxu0
    %2042 = vmatprep.mubr.bf16.mxu0 %v1211
    %2043 = vmatmul.mubr.bf16.gmra.mxu0 %v1210
    %v2044 = vpop.f32.mrf.mxu0
    %v2045 = vadd.f32 0.0, %v2044
    %v2046 = vpop.f32.mrf.mxu0
    %v2047 = vpop.f32.mrf.mxu0
    %v2048 = vadd.f32 0.0, %v2047
    %v2049 = vpop.f32.mrf.mxu0
    %2050 = vmatprep.mubr.bf16.mxu0 %v1215
    %2051 = vmatmul.mubr.bf16.gmra.mxu0 %v1214
    %v2052 = vpop.f32.mrf.mxu0
    %v2053 = vadd.f32 0.0, %v2052
    %v2054 = vpop.f32.mrf.mxu0
    %v2055 = vpop.f32.mrf.mxu0
    %v2056 = vadd.f32 0.0, %v2055
    %v2057 = vpop.f32.mrf.mxu0
    %2058 = vmatprep.mubr.bf16.mxu0 %v1219
    %2059 = vmatmul.mubr.bf16.gmra.mxu0 %v1218
    %v2060 = vpop.f32.mrf.mxu0
    %v2061 = vadd.f32 0.0, %v2060
    %v2062 = vpop.f32.mrf.mxu0
    %v2063 = vpop.f32.mrf.mxu0
    %v2064 = vadd.f32 0.0, %v2063
    %v2065 = vpop.f32.mrf.mxu0
    %2066 = vmatprep.mubr.bf16.mxu0 %v1223
    %2067 = vmatmul.mubr.bf16.gmra.mxu0 %v1222
    %v2068 = vpop.f32.mrf.mxu0
    %v2069 = vadd.f32 0.0, %v2068
    %v2070 = vpop.f32.mrf.mxu0
    %v2071 = vpop.f32.mrf.mxu0
    %v2072 = vadd.f32 0.0, %v2071
    %v2073 = vpop.f32.mrf.mxu0
    %2074 = vmatprep.mubr.bf16.mxu0 %v1227
    %2075 = vmatmul.mubr.bf16.gmra.mxu0 %v1226
    %v2076 = vpop.f32.mrf.mxu0
    %v2077 = vadd.f32 0.0, %v2076
    %v2078 = vpop.f32.mrf.mxu0
    %v2079 = vpop.f32.mrf.mxu0
    %v2080 = vadd.f32 0.0, %v2079
    %v2081 = vpop.f32.mrf.mxu0
    %2082 = vmatprep.mubr.bf16.mxu0 %v1231
    %2083 = vmatmul.mubr.bf16.gmra.mxu0 %v1230
    %v2084 = vpop.f32.mrf.mxu0
    %v2085 = vadd.f32 0.0, %v2084
    %v2086 = vpop.f32.mrf.mxu0
    %v2087 = vpop.f32.mrf.mxu0
    %v2088 = vadd.f32 0.0, %v2087
    %v2089 = vpop.f32.mrf.mxu0
    %2090 = vmatprep.mubr.bf16.mxu0 %v1235
    %2091 = vmatmul.mubr.bf16.gmra.mxu0 %v1234
    %v2092 = vpop.f32.mrf.mxu0
    %v2093 = vadd.f32 0.0, %v2092
    %v2094 = vpop.f32.mrf.mxu0
    %v2095 = vpop.f32.mrf.mxu0
    %v2096 = vadd.f32 0.0, %v2095
    %v2097 = vpop.f32.mrf.mxu0
    %2098 = vmatprep.mubr.bf16.mxu0 %v1239
    %2099 = vmatmul.mubr.bf16.gmra.mxu0 %v1238
    %v2100 = vpop.f32.mrf.mxu0
    %v2101 = vadd.f32 0.0, %v2100
    %v2102 = vpop.f32.mrf.mxu0
    %v2103 = vpop.f32.mrf.mxu0
    %v2104 = vadd.f32 0.0, %v2103
    %v2105 = vpop.f32.mrf.mxu0
    %2106 = vmatprep.mubr.bf16.mxu0 %v1243
    %2107 = vmatmul.mubr.bf16.gmra.mxu0 %v1242
    %v2108 = vpop.f32.mrf.mxu0
    %v2109 = vadd.f32 0.0, %v2108
    %v2110 = vpop.f32.mrf.mxu0
    %v2111 = vpop.f32.mrf.mxu0
    %v2112 = vadd.f32 0.0, %v2111
    %v2113 = vpop.f32.mrf.mxu0
    %2114 = vmatprep.mubr.bf16.mxu0 %v1247
    %2115 = vmatmul.mubr.bf16.gmra.mxu0 %v1246
    %v2116 = vpop.f32.mrf.mxu0
    %v2117 = vadd.f32 0.0, %v2116
    %v2118 = vpop.f32.mrf.mxu0
    %v2119 = vpop.f32.mrf.mxu0
    %v2120 = vadd.f32 0.0, %v2119
    %v2121 = vpop.f32.mrf.mxu0
    %2122 = vmatprep.mubr.bf16.mxu0 %v1251
    %2123 = vmatmul.mubr.bf16.gmra.mxu0 %v1250
    %v2124 = vpop.f32.mrf.mxu0
    %v2125 = vadd.f32 0.0, %v2124
    %v2126 = vpop.f32.mrf.mxu0
    %v2127 = vpop.f32.mrf.mxu0
    %v2128 = vadd.f32 0.0, %v2127
    %v2129 = vpop.f32.mrf.mxu0
    %2130 = vmatprep.mubr.bf16.mxu0 %v1255
    %2131 = vmatmul.mubr.bf16.gmra.mxu0 %v1254
    %v2132 = vpop.f32.mrf.mxu0
    %v2133 = vadd.f32 0.0, %v2132
    %v2134 = vpop.f32.mrf.mxu0
    %v2135 = vpop.f32.mrf.mxu0
    %v2136 = vadd.f32 0.0, %v2135
    %v2137 = vpop.f32.mrf.mxu0
    %2138 = vmatprep.mubr.bf16.mxu0 %v1259
    %2139 = vmatmul.mubr.bf16.gmra.mxu0 %v1258
    %v2140 = vpop.f32.mrf.mxu0
    %v2141 = vadd.f32 0.0, %v2140
    %v2142 = vpop.f32.mrf.mxu0
    %v2143 = vpop.f32.mrf.mxu0
    %v2144 = vadd.f32 0.0, %v2143
    %v2145 = vpop.f32.mrf.mxu0
    %2146 = vmatprep.mubr.bf16.mxu0 %v1263
    %2147 = vmatmul.mubr.bf16.gmra.mxu0 %v1262
    %v2148 = vpop.f32.mrf.mxu0
    %v2149 = vadd.f32 0.0, %v2148
    %v2150 = vpop.f32.mrf.mxu0
    %v2151 = vpop.f32.mrf.mxu0
    %v2152 = vadd.f32 0.0, %v2151
    %v2153 = vpop.f32.mrf.mxu0
    %2154 = vmatprep.mubr.bf16.mxu0 %v1267
    %2155 = vmatmul.mubr.bf16.gmra.mxu0 %v1266
    %v2156 = vpop.f32.mrf.mxu0
    %v2157 = vadd.f32 0.0, %v2156
    %v2158 = vpop.f32.mrf.mxu0
    %v2159 = vpop.f32.mrf.mxu0
    %v2160 = vadd.f32 0.0, %v2159
    %v2161 = vpop.f32.mrf.mxu0
    %2162 = vmatprep.mubr.bf16.mxu0 %v1271
    %2163 = vmatmul.mubr.bf16.gmra.mxu0 %v1270
    %v2164 = vpop.f32.mrf.mxu0
    %v2165 = vadd.f32 0.0, %v2164
    %v2166 = vpop.f32.mrf.mxu0
    %v2167 = vpop.f32.mrf.mxu0
    %v2168 = vadd.f32 0.0, %v2167
    %v2169 = vpop.f32.mrf.mxu0
    %2170 = vmatprep.mubr.bf16.mxu0 %v1275
    %2171 = vmatmul.mubr.bf16.gmra.mxu0 %v1274
    %v2172 = vpop.f32.mrf.mxu0
    %v2173 = vadd.f32 0.0, %v2172
    %v2174 = vpop.f32.mrf.mxu0
    %v2175 = vpop.f32.mrf.mxu0
    %v2176 = vadd.f32 0.0, %v2175
    %v2177 = vpop.f32.mrf.mxu0
    %2178 = vmatprep.mubr.bf16.mxu0 %v1279
    %2179 = vmatmul.mubr.bf16.gmra.mxu0 %v1278
    %v2180 = vpop.f32.mrf.mxu0
    %v2181 = vadd.f32 0.0, %v2180
    %v2182 = vpop.f32.mrf.mxu0
    %v2183 = vpop.f32.mrf.mxu0
    %v2184 = vadd.f32 0.0, %v2183
    %v2185 = vpop.f32.mrf.mxu0
    %2186 = vmatprep.mubr.bf16.mxu0 %v1283
    %2187 = vmatmul.mubr.bf16.gmra.mxu0 %v1282
    %v2188 = vpop.f32.mrf.mxu0
    %v2189 = vadd.f32 0.0, %v2188
    %v2190 = vpop.f32.mrf.mxu0
    %v2191 = vpop.f32.mrf.mxu0
    %v2192 = vadd.f32 0.0, %v2191
    %v2193 = vpop.f32.mrf.mxu0
    %2194 = vmatprep.mubr.bf16.mxu0 %v1287
    %2195 = vmatmul.mubr.bf16.gmra.mxu0 %v1286
    %v2196 = vpop.f32.mrf.mxu0
    %v2197 = vadd.f32 0.0, %v2196
    %v2198 = vpop.f32.mrf.mxu0
    %v2199 = vpop.f32.mrf.mxu0
    %v2200 = vadd.f32 0.0, %v2199
    %v2201 = vpop.f32.mrf.mxu0
    %2202 = vmatprep.mubr.bf16.mxu0 %v1291
    %2203 = vmatmul.mubr.bf16.gmra.mxu0 %v1290
    %v2204 = vpop.f32.mrf.mxu0
    %v2205 = vadd.f32 0.0, %v2204
    %v2206 = vpop.f32.mrf.mxu0
    %v2207 = vpop.f32.mrf.mxu0
    %v2208 = vadd.f32 0.0, %v2207
    %v2209 = vpop.f32.mrf.mxu0
    %2210 = vmatprep.mubr.bf16.mxu0 %v1295
    %2211 = vmatmul.mubr.bf16.gmra.mxu0 %v1294
    %v2212 = vpop.f32.mrf.mxu0
    %v2213 = vadd.f32 0.0, %v2212
    %v2214 = vpop.f32.mrf.mxu0
    %v2215 = vpop.f32.mrf.mxu0
    %v2216 = vadd.f32 0.0, %v2215
    %v2217 = vpop.f32.mrf.mxu0
    %2218 = vmatprep.mubr.bf16.mxu0 %v1299
    %2219 = vmatmul.mubr.bf16.gmra.mxu0 %v1298
    %v2220 = vpop.f32.mrf.mxu0
    %v2221 = vadd.f32 0.0, %v2220
    %v2222 = vpop.f32.mrf.mxu0
    %v2223 = vpop.f32.mrf.mxu0
    %v2224 = vadd.f32 0.0, %v2223
    %v2225 = vpop.f32.mrf.mxu0
    %2226 = vmatprep.mubr.bf16.mxu0 %v1303
    %2227 = vmatmul.mubr.bf16.gmra.mxu0 %v1302
    %v2228 = vpop.f32.mrf.mxu0
    %v2229 = vadd.f32 0.0, %v2228
    %v2230 = vpop.f32.mrf.mxu0
    %v2231 = vpop.f32.mrf.mxu0
    %v2232 = vadd.f32 0.0, %v2231
    %v2233 = vpop.f32.mrf.mxu0
    %2234 = vmatprep.mubr.bf16.mxu0 %v1307
    %2235 = vmatmul.mubr.bf16.gmra.mxu0 %v1306
    %v2236 = vpop.f32.mrf.mxu0
    %v2237 = vadd.f32 0.0, %v2236
    %v2238 = vpop.f32.mrf.mxu0
    %v2239 = vpop.f32.mrf.mxu0
    %v2240 = vadd.f32 0.0, %v2239
    %v2241 = vpop.f32.mrf.mxu0
    %2242 = vmatprep.mubr.bf16.mxu0 %v1311
    %2243 = vmatmul.mubr.bf16.gmra.mxu0 %v1310
    %v2244 = vpop.f32.mrf.mxu0
    %v2245 = vadd.f32 0.0, %v2244
    %v2246 = vpop.f32.mrf.mxu0
    %v2247 = vpop.f32.mrf.mxu0
    %v2248 = vadd.f32 0.0, %v2247
    %v2249 = vpop.f32.mrf.mxu0
    %2250 = vmatprep.mubr.bf16.mxu0 %v1315
    %2251 = vmatmul.mubr.bf16.gmra.mxu0 %v1314
    %v2252 = vpop.f32.mrf.mxu0
    %v2253 = vadd.f32 0.0, %v2252
    %v2254 = vpop.f32.mrf.mxu0
    %v2255 = vpop.f32.mrf.mxu0
    %v2256 = vadd.f32 0.0, %v2255
    %v2257 = vpop.f32.mrf.mxu0
    %2258 = vmatprep.mubr.bf16.mxu0 %v1319
    %2259 = vmatmul.mubr.bf16.gmra.mxu0 %v1318
    %v2260 = vpop.f32.mrf.mxu0
    %v2261 = vadd.f32 0.0, %v2260
    %v2262 = vpop.f32.mrf.mxu0
    %v2263 = vpop.f32.mrf.mxu0
    %v2264 = vadd.f32 0.0, %v2263
    %v2265 = vpop.f32.mrf.mxu0
    %2266 = vmatprep.mubr.bf16.mxu0 %v1323
    %2267 = vmatmul.mubr.bf16.gmra.mxu0 %v1322
    %v2268 = vpop.f32.mrf.mxu0
    %v2269 = vadd.f32 0.0, %v2268
    %v2270 = vpop.f32.mrf.mxu0
    %v2271 = vpop.f32.mrf.mxu0
    %v2272 = vadd.f32 0.0, %v2271
    %v2273 = vpop.f32.mrf.mxu0
    %2274 = vmatprep.mubr.bf16.mxu0 %v1327
    %2275 = vmatmul.mubr.bf16.gmra.mxu0 %v1326
    %v2276 = vpop.f32.mrf.mxu0
    %v2277 = vadd.f32 0.0, %v2276
    %v2278 = vpop.f32.mrf.mxu0
    %v2279 = vpop.f32.mrf.mxu0
    %v2280 = vadd.f32 0.0, %v2279
    %v2281 = vpop.f32.mrf.mxu0
    %2282 = vmatprep.mubr.bf16.mxu0 %v1331
    %2283 = vmatmul.mubr.bf16.gmra.mxu0 %v1330
    %v2284 = vpop.f32.mrf.mxu0
    %v2285 = vadd.f32 0.0, %v2284
    %v2286 = vpop.f32.mrf.mxu0
    %v2287 = vpop.f32.mrf.mxu0
    %v2288 = vadd.f32 0.0, %v2287
    %v2289 = vpop.f32.mrf.mxu0
    %2290 = vmatprep.mubr.bf16.mxu0 %v1335
    %2291 = vmatmul.mubr.bf16.gmra.mxu0 %v1334
    %v2292 = vpop.f32.mrf.mxu0
    %v2293 = vadd.f32 0.0, %v2292
    %v2294 = vpop.f32.mrf.mxu0
    %v2295 = vpop.f32.mrf.mxu0
    %v2296 = vadd.f32 0.0, %v2295
    %v2297 = vpop.f32.mrf.mxu0
    %2298 = vmatprep.mubr.bf16.mxu0 %v1339
    %2299 = vmatmul.mubr.bf16.gmra.mxu0 %v1338
    %v2300 = vpop.f32.mrf.mxu0
    %v2301 = vadd.f32 0.0, %v2300
    %v2302 = vpop.f32.mrf.mxu0
    %v2303 = vpop.f32.mrf.mxu0
    %v2304 = vadd.f32 0.0, %v2303
    %v2305 = vpop.f32.mrf.mxu0
    %2306 = vmatprep.mubr.bf16.mxu0 %v1343
    %2307 = vmatmul.mubr.bf16.gmra.mxu0 %v1342
    %v2308 = vpop.f32.mrf.mxu0
    %v2309 = vadd.f32 0.0, %v2308
    %v2310 = vpop.f32.mrf.mxu0
    %v2311 = vpop.f32.mrf.mxu0
    %v2312 = vadd.f32 0.0, %v2311
    %v2313 = vpop.f32.mrf.mxu0
    %2314 = vmatprep.mubr.bf16.mxu0 %v1347
    %2315 = vmatmul.mubr.bf16.gmra.mxu0 %v1346
    %v2316 = vpop.f32.mrf.mxu0
    %v2317 = vadd.f32 0.0, %v2316
    %v2318 = vpop.f32.mrf.mxu0
    %v2319 = vpop.f32.mrf.mxu0
    %v2320 = vadd.f32 0.0, %v2319
    %v2321 = vpop.f32.mrf.mxu0
    %2322 = vmatprep.mubr.bf16.mxu0 %v1351
    %2323 = vmatmul.mubr.bf16.gmra.mxu0 %v1350
    %v2324 = vpop.f32.mrf.mxu0
    %v2325 = vadd.f32 0.0, %v2324
    %v2326 = vpop.f32.mrf.mxu0
    %v2327 = vpop.f32.mrf.mxu0
    %v2328 = vadd.f32 0.0, %v2327
    %v2329 = vpop.f32.mrf.mxu0
    %2330 = vmatprep.mubr.bf16.mxu0 %v1355
    %2331 = vmatmul.mubr.bf16.gmra.mxu0 %v1354
    %v2332 = vpop.f32.mrf.mxu0
    %v2333 = vadd.f32 0.0, %v2332
    %v2334 = vpop.f32.mrf.mxu0
    %v2335 = vpop.f32.mrf.mxu0
    %v2336 = vadd.f32 0.0, %v2335
    %v2337 = vpop.f32.mrf.mxu0
    %2338 = vmatprep.mubr.bf16.mxu0 %v1359
    %2339 = vmatmul.mubr.bf16.gmra.mxu0 %v1358
    %v2340 = vpop.f32.mrf.mxu0
    %v2341 = vadd.f32 0.0, %v2340
    %v2342 = vpop.f32.mrf.mxu0
    %v2343 = vpop.f32.mrf.mxu0
    %v2344 = vadd.f32 0.0, %v2343
    %v2345 = vpop.f32.mrf.mxu0
    %2346 = vmatprep.mubr.bf16.mxu0 %v1363
    %2347 = vmatmul.mubr.bf16.gmra.mxu0 %v1362
    %v2348 = vpop.f32.mrf.mxu0
    %v2349 = vadd.f32 0.0, %v2348
    %v2350 = vpop.f32.mrf.mxu0
    %v2351 = vpop.f32.mrf.mxu0
    %v2352 = vadd.f32 0.0, %v2351
    %v2353 = vpop.f32.mrf.mxu0
    %2354 = vmatprep.mubr.bf16.mxu0 %v1367
    %2355 = vmatmul.mubr.bf16.gmra.mxu0 %v1366
    %v2356 = vpop.f32.mrf.mxu0
    %v2357 = vadd.f32 0.0, %v2356
    %v2358 = vpop.f32.mrf.mxu0
    %v2359 = vpop.f32.mrf.mxu0
    %v2360 = vadd.f32 0.0, %v2359
    %v2361 = vpop.f32.mrf.mxu0
    %2362 = vdwg.mxu0
    %2363 = vmatprep.subr.bf16.mxu0 0
    %2364 = vmatpush1.bf16.msra.mxu0 %v1777
    %2365 = vmatprep.subr.bf16.mxu0 0
    %2366 = vmatpush1.bf16.msra.mxu0 %v1776
    %2367 = vmatprep.subr.bf16.mxu0 0
    %2368 = vmatpush1.bf16.msra.mxu0 %v1775
    %2369 = vmatprep.subr.bf16.mxu0 0
    %2370 = vmatpush1.bf16.msra.mxu0 %v1774
    %2371 = vmatprep.subr.bf16.mxu0 0
    %2372 = vmatpush1.bf16.msra.mxu0 %v1773
    %2373 = vmatprep.subr.bf16.mxu0 0
    %2374 = vmatpush1.bf16.msra.mxu0 %v1772
    %2375 = vmatprep.subr.bf16.mxu0 0
    %2376 = vmatpush1.bf16.msra.mxu0 %v1771
    %2377 = vmatprep.subr.bf16.mxu0 0
    %2378 = vmatpush1.bf16.msra.mxu0 %v1770
    %2379 = vmatprep.subr.bf16.mxu0 0
    %2380 = vmatpush2.bf16.msra.mxu0 %v1785
    %2381 = vmatprep.subr.bf16.mxu0 0
    %2382 = vmatpush2.bf16.msra.mxu0 %v1784
    %2383 = vmatprep.subr.bf16.mxu0 0
    %2384 = vmatpush2.bf16.msra.mxu0 %v1783
    %2385 = vmatprep.subr.bf16.mxu0 0
    %2386 = vmatpush2.bf16.msra.mxu0 %v1782
    %2387 = vmatprep.subr.bf16.mxu0 0
    %2388 = vmatpush2.bf16.msra.mxu0 %v1781
    %2389 = vmatprep.subr.bf16.mxu0 0
    %2390 = vmatpush2.bf16.msra.mxu0 %v1780
    %2391 = vmatprep.subr.bf16.mxu0 0
    %2392 = vmatpush2.bf16.msra.mxu0 %v1779
    %2393 = vmatprep.subr.bf16.mxu0 0
    %2394 = vmatpush2.bf16.msra.mxu0 %v1778
    %2395 = vmatprep.mubr.bf16.mxu0 %v1117
    %2396 = vmatmul.mubr.bf16.gmra.mxu0 %v1116
    %v2397 = vpop.f32.mrf.mxu0
    %v2398 = vadd.f32 %v1853, %v2397
    %v2399 = vpop.f32.mrf.mxu0
    %v2400 = vpop.f32.mrf.mxu0
    %v2401 = vadd.f32 %v1856, %v2400
    %v2402 = vpop.f32.mrf.mxu0
    %2403 = vmatprep.mubr.bf16.mxu0 %v1121
    %2404 = vmatmul.mubr.bf16.gmra.mxu0 %v1120
    %v2405 = vpop.f32.mrf.mxu0
    %v2406 = vadd.f32 %v1861, %v2405
    %v2407 = vpop.f32.mrf.mxu0
    %v2408 = vpop.f32.mrf.mxu0
    %v2409 = vadd.f32 %v1864, %v2408
    %v2410 = vpop.f32.mrf.mxu0
    %2411 = vmatprep.mubr.bf16.mxu0 %v1125
    %2412 = vmatmul.mubr.bf16.gmra.mxu0 %v1124
    %v2413 = vpop.f32.mrf.mxu0
    %v2414 = vadd.f32 %v1869, %v2413
    %v2415 = vpop.f32.mrf.mxu0
    %v2416 = vpop.f32.mrf.mxu0
    %v2417 = vadd.f32 %v1872, %v2416
    %v2418 = vpop.f32.mrf.mxu0
    %2419 = vmatprep.mubr.bf16.mxu0 %v1129
    %2420 = vmatmul.mubr.bf16.gmra.mxu0 %v1128
    %v2421 = vpop.f32.mrf.mxu0
    %v2422 = vadd.f32 %v1877, %v2421
    %v2423 = vpop.f32.mrf.mxu0
    %v2424 = vpop.f32.mrf.mxu0
    %v2425 = vadd.f32 %v1880, %v2424
    %v2426 = vpop.f32.mrf.mxu0
    %2427 = vmatprep.mubr.bf16.mxu0 %v1133
    %2428 = vmatmul.mubr.bf16.gmra.mxu0 %v1132
    %v2429 = vpop.f32.mrf.mxu0
    %v2430 = vadd.f32 %v1885, %v2429
    %v2431 = vpop.f32.mrf.mxu0
    %v2432 = vpop.f32.mrf.mxu0
    %v2433 = vadd.f32 %v1888, %v2432
    %v2434 = vpop.f32.mrf.mxu0
    %2435 = vmatprep.mubr.bf16.mxu0 %v1137
    %2436 = vmatmul.mubr.bf16.gmra.mxu0 %v1136
    %v2437 = vpop.f32.mrf.mxu0
    %v2438 = vadd.f32 %v1893, %v2437
    %v2439 = vpop.f32.mrf.mxu0
    %v2440 = vpop.f32.mrf.mxu0
    %v2441 = vadd.f32 %v1896, %v2440
    %v2442 = vpop.f32.mrf.mxu0
    %2443 = vmatprep.mubr.bf16.mxu0 %v1141
    %2444 = vmatmul.mubr.bf16.gmra.mxu0 %v1140
    %v2445 = vpop.f32.mrf.mxu0
    %v2446 = vadd.f32 %v1901, %v2445
    %v2447 = vpop.f32.mrf.mxu0
    %v2448 = vpop.f32.mrf.mxu0
    %v2449 = vadd.f32 %v1904, %v2448
    %v2450 = vpop.f32.mrf.mxu0
    %2451 = vmatprep.mubr.bf16.mxu0 %v1145
    %2452 = vmatmul.mubr.bf16.gmra.mxu0 %v1144
    %v2453 = vpop.f32.mrf.mxu0
    %v2454 = vadd.f32 %v1909, %v2453
    %v2455 = vpop.f32.mrf.mxu0
    %v2456 = vpop.f32.mrf.mxu0
    %v2457 = vadd.f32 %v1912, %v2456
    %v2458 = vpop.f32.mrf.mxu0
    %2459 = vmatprep.mubr.bf16.mxu0 %v1149
    %2460 = vmatmul.mubr.bf16.gmra.mxu0 %v1148
    %v2461 = vpop.f32.mrf.mxu0
    %v2462 = vadd.f32 %v1917, %v2461
    %v2463 = vpop.f32.mrf.mxu0
    %v2464 = vpop.f32.mrf.mxu0
    %v2465 = vadd.f32 %v1920, %v2464
    %v2466 = vpop.f32.mrf.mxu0
    %2467 = vmatprep.mubr.bf16.mxu0 %v1153
    %2468 = vmatmul.mubr.bf16.gmra.mxu0 %v1152
    %v2469 = vpop.f32.mrf.mxu0
    %v2470 = vadd.f32 %v1925, %v2469
    %v2471 = vpop.f32.mrf.mxu0
    %v2472 = vpop.f32.mrf.mxu0
    %v2473 = vadd.f32 %v1928, %v2472
    %v2474 = vpop.f32.mrf.mxu0
    %2475 = vmatprep.mubr.bf16.mxu0 %v1157
    %2476 = vmatmul.mubr.bf16.gmra.mxu0 %v1156
    %v2477 = vpop.f32.mrf.mxu0
    %v2478 = vadd.f32 %v1933, %v2477
    %v2479 = vpop.f32.mrf.mxu0
    %v2480 = vpop.f32.mrf.mxu0
    %v2481 = vadd.f32 %v1936, %v2480
    %v2482 = vpop.f32.mrf.mxu0
    %2483 = vmatprep.mubr.bf16.mxu0 %v1161
    %2484 = vmatmul.mubr.bf16.gmra.mxu0 %v1160
    %v2485 = vpop.f32.mrf.mxu0
    %v2486 = vadd.f32 %v1941, %v2485
    %v2487 = vpop.f32.mrf.mxu0
    %v2488 = vpop.f32.mrf.mxu0
    %v2489 = vadd.f32 %v1944, %v2488
    %v2490 = vpop.f32.mrf.mxu0
    %2491 = vmatprep.mubr.bf16.mxu0 %v1165
    %2492 = vmatmul.mubr.bf16.gmra.mxu0 %v1164
    %v2493 = vpop.f32.mrf.mxu0
    %v2494 = vadd.f32 %v1949, %v2493
    %v2495 = vpop.f32.mrf.mxu0
    %v2496 = vpop.f32.mrf.mxu0
    %v2497 = vadd.f32 %v1952, %v2496
    %v2498 = vpop.f32.mrf.mxu0
    %2499 = vmatprep.mubr.bf16.mxu0 %v1169
    %2500 = vmatmul.mubr.bf16.gmra.mxu0 %v1168
    %v2501 = vpop.f32.mrf.mxu0
    %v2502 = vadd.f32 %v1957, %v2501
    %v2503 = vpop.f32.mrf.mxu0
    %v2504 = vpop.f32.mrf.mxu0
    %v2505 = vadd.f32 %v1960, %v2504
    %v2506 = vpop.f32.mrf.mxu0
    %2507 = vmatprep.mubr.bf16.mxu0 %v1173
    %2508 = vmatmul.mubr.bf16.gmra.mxu0 %v1172
    %v2509 = vpop.f32.mrf.mxu0
    %v2510 = vadd.f32 %v1965, %v2509
    %v2511 = vpop.f32.mrf.mxu0
    %v2512 = vpop.f32.mrf.mxu0
    %v2513 = vadd.f32 %v1968, %v2512
    %v2514 = vpop.f32.mrf.mxu0
    %2515 = vmatprep.mubr.bf16.mxu0 %v1177
    %2516 = vmatmul.mubr.bf16.gmra.mxu0 %v1176
    %v2517 = vpop.f32.mrf.mxu0
    %v2518 = vadd.f32 %v1973, %v2517
    %v2519 = vpop.f32.mrf.mxu0
    %v2520 = vpop.f32.mrf.mxu0
    %v2521 = vadd.f32 %v1976, %v2520
    %v2522 = vpop.f32.mrf.mxu0
    %2523 = vmatprep.mubr.bf16.mxu0 %v1181
    %2524 = vmatmul.mubr.bf16.gmra.mxu0 %v1180
    %v2525 = vpop.f32.mrf.mxu0
    %v2526 = vadd.f32 %v1981, %v2525
    %v2527 = vpop.f32.mrf.mxu0
    %v2528 = vpop.f32.mrf.mxu0
    %v2529 = vadd.f32 %v1984, %v2528
    %v2530 = vpop.f32.mrf.mxu0
    %2531 = vmatprep.mubr.bf16.mxu0 %v1185
    %2532 = vmatmul.mubr.bf16.gmra.mxu0 %v1184
    %v2533 = vpop.f32.mrf.mxu0
    %v2534 = vadd.f32 %v1989, %v2533
    %v2535 = vpop.f32.mrf.mxu0
    %v2536 = vpop.f32.mrf.mxu0
    %v2537 = vadd.f32 %v1992, %v2536
    %v2538 = vpop.f32.mrf.mxu0
    %2539 = vmatprep.mubr.bf16.mxu0 %v1189
    %2540 = vmatmul.mubr.bf16.gmra.mxu0 %v1188
    %v2541 = vpop.f32.mrf.mxu0
    %v2542 = vadd.f32 %v1997, %v2541
    %v2543 = vpop.f32.mrf.mxu0
    %v2544 = vpop.f32.mrf.mxu0
    %v2545 = vadd.f32 %v2000, %v2544
    %v2546 = vpop.f32.mrf.mxu0
    %2547 = vmatprep.mubr.bf16.mxu0 %v1193
    %2548 = vmatmul.mubr.bf16.gmra.mxu0 %v1192
    %v2549 = vpop.f32.mrf.mxu0
    %v2550 = vadd.f32 %v2005, %v2549
    %v2551 = vpop.f32.mrf.mxu0
    %v2552 = vpop.f32.mrf.mxu0
    %v2553 = vadd.f32 %v2008, %v2552
    %v2554 = vpop.f32.mrf.mxu0
    %2555 = vmatprep.mubr.bf16.mxu0 %v1197
    %2556 = vmatmul.mubr.bf16.gmra.mxu0 %v1196
    %v2557 = vpop.f32.mrf.mxu0
    %v2558 = vadd.f32 %v2013, %v2557
    %v2559 = vpop.f32.mrf.mxu0
    %v2560 = vpop.f32.mrf.mxu0
    %v2561 = vadd.f32 %v2016, %v2560
    %v2562 = vpop.f32.mrf.mxu0
    %2563 = vmatprep.mubr.bf16.mxu0 %v1201
    %2564 = vmatmul.mubr.bf16.gmra.mxu0 %v1200
    %v2565 = vpop.f32.mrf.mxu0
    %v2566 = vadd.f32 %v2021, %v2565
    %v2567 = vpop.f32.mrf.mxu0
    %v2568 = vpop.f32.mrf.mxu0
    %v2569 = vadd.f32 %v2024, %v2568
    %v2570 = vpop.f32.mrf.mxu0
    %2571 = vmatprep.mubr.bf16.mxu0 %v1205
    %2572 = vmatmul.mubr.bf16.gmra.mxu0 %v1204
    %v2573 = vpop.f32.mrf.mxu0
    %v2574 = vadd.f32 %v2029, %v2573
    %v2575 = vpop.f32.mrf.mxu0
    %v2576 = vpop.f32.mrf.mxu0
    %v2577 = vadd.f32 %v2032, %v2576
    %v2578 = vpop.f32.mrf.mxu0
    %2579 = vmatprep.mubr.bf16.mxu0 %v1209
    %2580 = vmatmul.mubr.bf16.gmra.mxu0 %v1208
    %v2581 = vpop.f32.mrf.mxu0
    %v2582 = vadd.f32 %v2037, %v2581
    %v2583 = vpop.f32.mrf.mxu0
    %v2584 = vpop.f32.mrf.mxu0
    %v2585 = vadd.f32 %v2040, %v2584
    %v2586 = vpop.f32.mrf.mxu0
    %2587 = vmatprep.mubr.bf16.mxu0 %v1213
    %2588 = vmatmul.mubr.bf16.gmra.mxu0 %v1212
    %v2589 = vpop.f32.mrf.mxu0
    %v2590 = vadd.f32 %v2045, %v2589
    %v2591 = vpop.f32.mrf.mxu0
    %v2592 = vpop.f32.mrf.mxu0
    %v2593 = vadd.f32 %v2048, %v2592
    %v2594 = vpop.f32.mrf.mxu0
    %2595 = vmatprep.mubr.bf16.mxu0 %v1217
    %2596 = vmatmul.mubr.bf16.gmra.mxu0 %v1216
    %v2597 = vpop.f32.mrf.mxu0
    %v2598 = vadd.f32 %v2053, %v2597
    %v2599 = vpop.f32.mrf.mxu0
    %v2600 = vpop.f32.mrf.mxu0
    %v2601 = vadd.f32 %v2056, %v2600
    %v2602 = vpop.f32.mrf.mxu0
    %2603 = vmatprep.mubr.bf16.mxu0 %v1221
    %2604 = vmatmul.mubr.bf16.gmra.mxu0 %v1220
    %v2605 = vpop.f32.mrf.mxu0
    %v2606 = vadd.f32 %v2061, %v2605
    %v2607 = vpop.f32.mrf.mxu0
    %v2608 = vpop.f32.mrf.mxu0
    %v2609 = vadd.f32 %v2064, %v2608
    %v2610 = vpop.f32.mrf.mxu0
    %2611 = vmatprep.mubr.bf16.mxu0 %v1225
    %2612 = vmatmul.mubr.bf16.gmra.mxu0 %v1224
    %v2613 = vpop.f32.mrf.mxu0
    %v2614 = vadd.f32 %v2069, %v2613
    %v2615 = vpop.f32.mrf.mxu0
    %v2616 = vpop.f32.mrf.mxu0
    %v2617 = vadd.f32 %v2072, %v2616
    %v2618 = vpop.f32.mrf.mxu0
    %2619 = vmatprep.mubr.bf16.mxu0 %v1229
    %2620 = vmatmul.mubr.bf16.gmra.mxu0 %v1228
    %v2621 = vpop.f32.mrf.mxu0
    %v2622 = vadd.f32 %v2077, %v2621
    %v2623 = vpop.f32.mrf.mxu0
    %v2624 = vpop.f32.mrf.mxu0
    %v2625 = vadd.f32 %v2080, %v2624
    %v2626 = vpop.f32.mrf.mxu0
    %2627 = vmatprep.mubr.bf16.mxu0 %v1233
    %2628 = vmatmul.mubr.bf16.gmra.mxu0 %v1232
    %v2629 = vpop.f32.mrf.mxu0
    %v2630 = vadd.f32 %v2085, %v2629
    %v2631 = vpop.f32.mrf.mxu0
    %v2632 = vpop.f32.mrf.mxu0
    %v2633 = vadd.f32 %v2088, %v2632
    %v2634 = vpop.f32.mrf.mxu0
    %2635 = vmatprep.mubr.bf16.mxu0 %v1237
    %2636 = vmatmul.mubr.bf16.gmra.mxu0 %v1236
    %v2637 = vpop.f32.mrf.mxu0
    %v2638 = vadd.f32 %v2093, %v2637
    %v2639 = vpop.f32.mrf.mxu0
    %v2640 = vpop.f32.mrf.mxu0
    %v2641 = vadd.f32 %v2096, %v2640
    %v2642 = vpop.f32.mrf.mxu0
    %2643 = vmatprep.mubr.bf16.mxu0 %v1241
    %2644 = vmatmul.mubr.bf16.gmra.mxu0 %v1240
    %v2645 = vpop.f32.mrf.mxu0
    %v2646 = vadd.f32 %v2101, %v2645
    %v2647 = vpop.f32.mrf.mxu0
    %v2648 = vpop.f32.mrf.mxu0
    %v2649 = vadd.f32 %v2104, %v2648
    %v2650 = vpop.f32.mrf.mxu0
    %2651 = vmatprep.mubr.bf16.mxu0 %v1245
    %2652 = vmatmul.mubr.bf16.gmra.mxu0 %v1244
    %v2653 = vpop.f32.mrf.mxu0
    %v2654 = vadd.f32 %v2109, %v2653
    %v2655 = vpop.f32.mrf.mxu0
    %v2656 = vpop.f32.mrf.mxu0
    %v2657 = vadd.f32 %v2112, %v2656
    %v2658 = vpop.f32.mrf.mxu0
    %2659 = vmatprep.mubr.bf16.mxu0 %v1249
    %2660 = vmatmul.mubr.bf16.gmra.mxu0 %v1248
    %v2661 = vpop.f32.mrf.mxu0
    %v2662 = vadd.f32 %v2117, %v2661
    %v2663 = vpop.f32.mrf.mxu0
    %v2664 = vpop.f32.mrf.mxu0
    %v2665 = vadd.f32 %v2120, %v2664
    %v2666 = vpop.f32.mrf.mxu0
    %2667 = vmatprep.mubr.bf16.mxu0 %v1253
    %2668 = vmatmul.mubr.bf16.gmra.mxu0 %v1252
    %v2669 = vpop.f32.mrf.mxu0
    %v2670 = vadd.f32 %v2125, %v2669
    %v2671 = vpop.f32.mrf.mxu0
    %v2672 = vpop.f32.mrf.mxu0
    %v2673 = vadd.f32 %v2128, %v2672
    %v2674 = vpop.f32.mrf.mxu0
    %2675 = vmatprep.mubr.bf16.mxu0 %v1257
    %2676 = vmatmul.mubr.bf16.gmra.mxu0 %v1256
    %v2677 = vpop.f32.mrf.mxu0
    %v2678 = vadd.f32 %v2133, %v2677
    %v2679 = vpop.f32.mrf.mxu0
    %v2680 = vpop.f32.mrf.mxu0
    %v2681 = vadd.f32 %v2136, %v2680
    %v2682 = vpop.f32.mrf.mxu0
    %2683 = vmatprep.mubr.bf16.mxu0 %v1261
    %2684 = vmatmul.mubr.bf16.gmra.mxu0 %v1260
    %v2685 = vpop.f32.mrf.mxu0
    %v2686 = vadd.f32 %v2141, %v2685
    %v2687 = vpop.f32.mrf.mxu0
    %v2688 = vpop.f32.mrf.mxu0
    %v2689 = vadd.f32 %v2144, %v2688
    %v2690 = vpop.f32.mrf.mxu0
    %2691 = vmatprep.mubr.bf16.mxu0 %v1265
    %2692 = vmatmul.mubr.bf16.gmra.mxu0 %v1264
    %v2693 = vpop.f32.mrf.mxu0
    %v2694 = vadd.f32 %v2149, %v2693
    %v2695 = vpop.f32.mrf.mxu0
    %v2696 = vpop.f32.mrf.mxu0
    %v2697 = vadd.f32 %v2152, %v2696
    %v2698 = vpop.f32.mrf.mxu0
    %2699 = vmatprep.mubr.bf16.mxu0 %v1269
    %2700 = vmatmul.mubr.bf16.gmra.mxu0 %v1268
    %v2701 = vpop.f32.mrf.mxu0
    %v2702 = vadd.f32 %v2157, %v2701
    %v2703 = vpop.f32.mrf.mxu0
    %v2704 = vpop.f32.mrf.mxu0
    %v2705 = vadd.f32 %v2160, %v2704
    %v2706 = vpop.f32.mrf.mxu0
    %2707 = vmatprep.mubr.bf16.mxu0 %v1273
    %2708 = vmatmul.mubr.bf16.gmra.mxu0 %v1272
    %v2709 = vpop.f32.mrf.mxu0
    %v2710 = vadd.f32 %v2165, %v2709
    %v2711 = vpop.f32.mrf.mxu0
    %v2712 = vpop.f32.mrf.mxu0
    %v2713 = vadd.f32 %v2168, %v2712
    %v2714 = vpop.f32.mrf.mxu0
    %2715 = vmatprep.mubr.bf16.mxu0 %v1277
    %2716 = vmatmul.mubr.bf16.gmra.mxu0 %v1276
    %v2717 = vpop.f32.mrf.mxu0
    %v2718 = vadd.f32 %v2173, %v2717
    %v2719 = vpop.f32.mrf.mxu0
    %v2720 = vpop.f32.mrf.mxu0
    %v2721 = vadd.f32 %v2176, %v2720
    %v2722 = vpop.f32.mrf.mxu0
    %2723 = vmatprep.mubr.bf16.mxu0 %v1281
    %2724 = vmatmul.mubr.bf16.gmra.mxu0 %v1280
    %v2725 = vpop.f32.mrf.mxu0
    %v2726 = vadd.f32 %v2181, %v2725
    %v2727 = vpop.f32.mrf.mxu0
    %v2728 = vpop.f32.mrf.mxu0
    %v2729 = vadd.f32 %v2184, %v2728
    %v2730 = vpop.f32.mrf.mxu0
    %2731 = vmatprep.mubr.bf16.mxu0 %v1285
    %2732 = vmatmul.mubr.bf16.gmra.mxu0 %v1284
    %v2733 = vpop.f32.mrf.mxu0
    %v2734 = vadd.f32 %v2189, %v2733
    %v2735 = vpop.f32.mrf.mxu0
    %v2736 = vpop.f32.mrf.mxu0
    %v2737 = vadd.f32 %v2192, %v2736
    %v2738 = vpop.f32.mrf.mxu0
    %2739 = vmatprep.mubr.bf16.mxu0 %v1289
    %2740 = vmatmul.mubr.bf16.gmra.mxu0 %v1288
    %v2741 = vpop.f32.mrf.mxu0
    %v2742 = vadd.f32 %v2197, %v2741
    %v2743 = vpop.f32.mrf.mxu0
    %v2744 = vpop.f32.mrf.mxu0
    %v2745 = vadd.f32 %v2200, %v2744
    %v2746 = vpop.f32.mrf.mxu0
    %2747 = vmatprep.mubr.bf16.mxu0 %v1293
    %2748 = vmatmul.mubr.bf16.gmra.mxu0 %v1292
    %v2749 = vpop.f32.mrf.mxu0
    %v2750 = vadd.f32 %v2205, %v2749
    %v2751 = vpop.f32.mrf.mxu0
    %v2752 = vpop.f32.mrf.mxu0
    %v2753 = vadd.f32 %v2208, %v2752
    %v2754 = vpop.f32.mrf.mxu0
    %2755 = vmatprep.mubr.bf16.mxu0 %v1297
    %2756 = vmatmul.mubr.bf16.gmra.mxu0 %v1296
    %v2757 = vpop.f32.mrf.mxu0
    %v2758 = vadd.f32 %v2213, %v2757
    %v2759 = vpop.f32.mrf.mxu0
    %v2760 = vpop.f32.mrf.mxu0
    %v2761 = vadd.f32 %v2216, %v2760
    %v2762 = vpop.f32.mrf.mxu0
    %2763 = vmatprep.mubr.bf16.mxu0 %v1301
    %2764 = vmatmul.mubr.bf16.gmra.mxu0 %v1300
    %v2765 = vpop.f32.mrf.mxu0
    %v2766 = vadd.f32 %v2221, %v2765
    %v2767 = vpop.f32.mrf.mxu0
    %v2768 = vpop.f32.mrf.mxu0
    %v2769 = vadd.f32 %v2224, %v2768
    %v2770 = vpop.f32.mrf.mxu0
    %2771 = vmatprep.mubr.bf16.mxu0 %v1305
    %2772 = vmatmul.mubr.bf16.gmra.mxu0 %v1304
    %v2773 = vpop.f32.mrf.mxu0
    %v2774 = vadd.f32 %v2229, %v2773
    %v2775 = vpop.f32.mrf.mxu0
    %v2776 = vpop.f32.mrf.mxu0
    %v2777 = vadd.f32 %v2232, %v2776
    %v2778 = vpop.f32.mrf.mxu0
    %2779 = vmatprep.mubr.bf16.mxu0 %v1309
    %2780 = vmatmul.mubr.bf16.gmra.mxu0 %v1308
    %v2781 = vpop.f32.mrf.mxu0
    %v2782 = vadd.f32 %v2237, %v2781
    %v2783 = vpop.f32.mrf.mxu0
    %v2784 = vpop.f32.mrf.mxu0
    %v2785 = vadd.f32 %v2240, %v2784
    %v2786 = vpop.f32.mrf.mxu0
    %2787 = vmatprep.mubr.bf16.mxu0 %v1313
    %2788 = vmatmul.mubr.bf16.gmra.mxu0 %v1312
    %v2789 = vpop.f32.mrf.mxu0
    %v2790 = vadd.f32 %v2245, %v2789
    %v2791 = vpop.f32.mrf.mxu0
    %v2792 = vpop.f32.mrf.mxu0
    %v2793 = vadd.f32 %v2248, %v2792
    %v2794 = vpop.f32.mrf.mxu0
    %2795 = vmatprep.mubr.bf16.mxu0 %v1317
    %2796 = vmatmul.mubr.bf16.gmra.mxu0 %v1316
    %v2797 = vpop.f32.mrf.mxu0
    %v2798 = vadd.f32 %v2253, %v2797
    %v2799 = vpop.f32.mrf.mxu0
    %v2800 = vpop.f32.mrf.mxu0
    %v2801 = vadd.f32 %v2256, %v2800
    %v2802 = vpop.f32.mrf.mxu0
    %2803 = vmatprep.mubr.bf16.mxu0 %v1321
    %2804 = vmatmul.mubr.bf16.gmra.mxu0 %v1320
    %v2805 = vpop.f32.mrf.mxu0
    %v2806 = vadd.f32 %v2261, %v2805
    %v2807 = vpop.f32.mrf.mxu0
    %v2808 = vpop.f32.mrf.mxu0
    %v2809 = vadd.f32 %v2264, %v2808
    %v2810 = vpop.f32.mrf.mxu0
    %2811 = vmatprep.mubr.bf16.mxu0 %v1325
    %2812 = vmatmul.mubr.bf16.gmra.mxu0 %v1324
    %v2813 = vpop.f32.mrf.mxu0
    %v2814 = vadd.f32 %v2269, %v2813
    %v2815 = vpop.f32.mrf.mxu0
    %v2816 = vpop.f32.mrf.mxu0
    %v2817 = vadd.f32 %v2272, %v2816
    %v2818 = vpop.f32.mrf.mxu0
    %2819 = vmatprep.mubr.bf16.mxu0 %v1329
    %2820 = vmatmul.mubr.bf16.gmra.mxu0 %v1328
    %v2821 = vpop.f32.mrf.mxu0
    %v2822 = vadd.f32 %v2277, %v2821
    %v2823 = vpop.f32.mrf.mxu0
    %v2824 = vpop.f32.mrf.mxu0
    %v2825 = vadd.f32 %v2280, %v2824
    %v2826 = vpop.f32.mrf.mxu0
    %2827 = vmatprep.mubr.bf16.mxu0 %v1333
    %2828 = vmatmul.mubr.bf16.gmra.mxu0 %v1332
    %v2829 = vpop.f32.mrf.mxu0
    %v2830 = vadd.f32 %v2285, %v2829
    %v2831 = vpop.f32.mrf.mxu0
    %v2832 = vpop.f32.mrf.mxu0
    %v2833 = vadd.f32 %v2288, %v2832
    %v2834 = vpop.f32.mrf.mxu0
    %2835 = vmatprep.mubr.bf16.mxu0 %v1337
    %2836 = vmatmul.mubr.bf16.gmra.mxu0 %v1336
    %v2837 = vpop.f32.mrf.mxu0
    %v2838 = vadd.f32 %v2293, %v2837
    %v2839 = vpop.f32.mrf.mxu0
    %v2840 = vpop.f32.mrf.mxu0
    %v2841 = vadd.f32 %v2296, %v2840
    %v2842 = vpop.f32.mrf.mxu0
    %2843 = vmatprep.mubr.bf16.mxu0 %v1341
    %2844 = vmatmul.mubr.bf16.gmra.mxu0 %v1340
    %v2845 = vpop.f32.mrf.mxu0
    %v2846 = vadd.f32 %v2301, %v2845
    %v2847 = vpop.f32.mrf.mxu0
    %v2848 = vpop.f32.mrf.mxu0
    %v2849 = vadd.f32 %v2304, %v2848
    %v2850 = vpop.f32.mrf.mxu0
    %2851 = vmatprep.mubr.bf16.mxu0 %v1345
    %2852 = vmatmul.mubr.bf16.gmra.mxu0 %v1344
    %v2853 = vpop.f32.mrf.mxu0
    %v2854 = vadd.f32 %v2309, %v2853
    %v2855 = vpop.f32.mrf.mxu0
    %v2856 = vpop.f32.mrf.mxu0
    %v2857 = vadd.f32 %v2312, %v2856
    %v2858 = vpop.f32.mrf.mxu0
    %2859 = vmatprep.mubr.bf16.mxu0 %v1349
    %2860 = vmatmul.mubr.bf16.gmra.mxu0 %v1348
    %v2861 = vpop.f32.mrf.mxu0
    %v2862 = vadd.f32 %v2317, %v2861
    %v2863 = vpop.f32.mrf.mxu0
    %v2864 = vpop.f32.mrf.mxu0
    %v2865 = vadd.f32 %v2320, %v2864
    %v2866 = vpop.f32.mrf.mxu0
    %2867 = vmatprep.mubr.bf16.mxu0 %v1353
    %2868 = vmatmul.mubr.bf16.gmra.mxu0 %v1352
    %v2869 = vpop.f32.mrf.mxu0
    %v2870 = vadd.f32 %v2325, %v2869
    %v2871 = vpop.f32.mrf.mxu0
    %v2872 = vpop.f32.mrf.mxu0
    %v2873 = vadd.f32 %v2328, %v2872
    %v2874 = vpop.f32.mrf.mxu0
    %2875 = vmatprep.mubr.bf16.mxu0 %v1357
    %2876 = vmatmul.mubr.bf16.gmra.mxu0 %v1356
    %v2877 = vpop.f32.mrf.mxu0
    %v2878 = vadd.f32 %v2333, %v2877
    %v2879 = vpop.f32.mrf.mxu0
    %v2880 = vpop.f32.mrf.mxu0
    %v2881 = vadd.f32 %v2336, %v2880
    %v2882 = vpop.f32.mrf.mxu0
    %2883 = vmatprep.mubr.bf16.mxu0 %v1361
    %2884 = vmatmul.mubr.bf16.gmra.mxu0 %v1360
    %v2885 = vpop.f32.mrf.mxu0
    %v2886 = vadd.f32 %v2341, %v2885
    %v2887 = vpop.f32.mrf.mxu0
    %v2888 = vpop.f32.mrf.mxu0
    %v2889 = vadd.f32 %v2344, %v2888
    %v2890 = vpop.f32.mrf.mxu0
    %2891 = vmatprep.mubr.bf16.mxu0 %v1365
    %2892 = vmatmul.mubr.bf16.gmra.mxu0 %v1364
    %v2893 = vpop.f32.mrf.mxu0
    %v2894 = vadd.f32 %v2349, %v2893
    %v2895 = vpop.f32.mrf.mxu0
    %v2896 = vpop.f32.mrf.mxu0
    %v2897 = vadd.f32 %v2352, %v2896
    %v2898 = vpop.f32.mrf.mxu0
    %2899 = vmatprep.mubr.bf16.mxu0 %v1369
    %2900 = vmatmul.mubr.bf16.gmra.mxu0 %v1368
    %v2901 = vpop.f32.mrf.mxu0
    %v2902 = vadd.f32 %v2357, %v2901
    %v2903 = vpop.f32.mrf.mxu0
    %v2904 = vpop.f32.mrf.mxu0
    %v2905 = vadd.f32 %v2360, %v2904
    %v2906 = vpop.f32.mrf.mxu0
    %2907 = vdwg.mxu0
    %vm2908 = vcmask 15360
    %2909 = vst.msk [vmem:[%s2] sm:$0xff] %vm2908, %v2398
    %2910 = vst.msk [vmem:[%s2 + $0x8] sm:$0xff] %vm2908, %v2401
    %2911 = vst.msk [vmem:[%s2 + $0x10] sm:$0xff] %vm2908, %v2406
    %2912 = vst.msk [vmem:[%s2 + $0x18] sm:$0xff] %vm2908, %v2409
    %2913 = vst.msk [vmem:[%s2 + $0x20] sm:$0xff] %vm2908, %v2414
    %2914 = vst.msk [vmem:[%s2 + $0x28] sm:$0xff] %vm2908, %v2417
    %2915 = vst.msk [vmem:[%s2 + $0x30] sm:$0xff] %vm2908, %v2422
    %2916 = vst.msk [vmem:[%s2 + $0x38] sm:$0xff] %vm2908, %v2425
    %2917 = vst.msk [vmem:[%s2 + $0x40] sm:$0xff] %vm2908, %v2430
    %2918 = vst.msk [vmem:[%s2 + $0x48] sm:$0xff] %vm2908, %v2433
    %2919 = vst.msk [vmem:[%s2 + $0x50] sm:$0xff] %vm2908, %v2438
    %2920 = vst.msk [vmem:[%s2 + $0x58] sm:$0xff] %vm2908, %v2441
    %2921 = vst.msk [vmem:[%s2 + $0x60] sm:$0xff] %vm2908, %v2446
    %2922 = vst.msk [vmem:[%s2 + $0x68] sm:$0xff] %vm2908, %v2449
    %2923 = vst.msk [vmem:[%s2 + $0x70] sm:$0xff] %vm2908, %v2454
    %2924 = vst.msk [vmem:[%s2 + $0x78] sm:$0xff] %vm2908, %v2457
    %2925 = vst.msk [vmem:[%s2 + $0x80] sm:$0xff] %vm2908, %v2462
    %2926 = vst.msk [vmem:[%s2 + $0x88] sm:$0xff] %vm2908, %v2465
    %2927 = vst.msk [vmem:[%s2 + $0x90] sm:$0xff] %vm2908, %v2470
    %2928 = vst.msk [vmem:[%s2 + $0x98] sm:$0xff] %vm2908, %v2473
    %2929 = vst.msk [vmem:[%s2 + $0xa0] sm:$0xff] %vm2908, %v2478
    %2930 = vst.msk [vmem:[%s2 + $0xa8] sm:$0xff] %vm2908, %v2481
    %2931 = vst.msk [vmem:[%s2 + $0xb0] sm:$0xff] %vm2908, %v2486
    %2932 = vst.msk [vmem:[%s2 + $0xb8] sm:$0xff] %vm2908, %v2489
    %2933 = vst.msk [vmem:[%s2 + $0xc0] sm:$0xff] %vm2908, %v2494
    %2934 = vst.msk [vmem:[%s2 + $0xc8] sm:$0xff] %vm2908, %v2497
    %2935 = vst.msk [vmem:[%s2 + $0xd0] sm:$0xff] %vm2908, %v2502
    %2936 = vst.msk [vmem:[%s2 + $0xd8] sm:$0xff] %vm2908, %v2505
    %2937 = vst.msk [vmem:[%s2 + $0xe0] sm:$0xff] %vm2908, %v2510
    %2938 = vst.msk [vmem:[%s2 + $0xe8] sm:$0xff] %vm2908, %v2513
    %2939 = vst.msk [vmem:[%s2 + $0xf0] sm:$0xff] %vm2908, %v2518
    %2940 = vst.msk [vmem:[%s2 + $0xf8] sm:$0xff] %vm2908, %v2521
    %2941 = vst.msk [vmem:[%s2 + $0x100] sm:$0xff] %vm2908, %v2526
    %2942 = vst.msk [vmem:[%s2 + $0x108] sm:$0xff] %vm2908, %v2529
    %2943 = vst.msk [vmem:[%s2 + $0x110] sm:$0xff] %vm2908, %v2534
    %2944 = vst.msk [vmem:[%s2 + $0x118] sm:$0xff] %vm2908, %v2537
    %2945 = vst.msk [vmem:[%s2 + $0x120] sm:$0xff] %vm2908, %v2542
    %2946 = vst.msk [vmem:[%s2 + $0x128] sm:$0xff] %vm2908, %v2545
    %2947 = vst.msk [vmem:[%s2 + $0x130] sm:$0xff] %vm2908, %v2550
    %2948 = vst.msk [vmem:[%s2 + $0x138] sm:$0xff] %vm2908, %v2553
    %2949 = vst.msk [vmem:[%s2 + $0x140] sm:$0xff] %vm2908, %v2558
    %2950 = vst.msk [vmem:[%s2 + $0x148] sm:$0xff] %vm2908, %v2561
    %2951 = vst.msk [vmem:[%s2 + $0x150] sm:$0xff] %vm2908, %v2566
    %2952 = vst.msk [vmem:[%s2 + $0x158] sm:$0xff] %vm2908, %v2569
    %2953 = vst.msk [vmem:[%s2 + $0x160] sm:$0xff] %vm2908, %v2574
    %2954 = vst.msk [vmem:[%s2 + $0x168] sm:$0xff] %vm2908, %v2577
    %2955 = vst.msk [vmem:[%s2 + $0x170] sm:$0xff] %vm2908, %v2582
    %2956 = vst.msk [vmem:[%s2 + $0x178] sm:$0xff] %vm2908, %v2585
    %2957 = vst.msk [vmem:[%s2 + $0x180] sm:$0xff] %vm2908, %v2590
    %2958 = vst.msk [vmem:[%s2 + $0x188] sm:$0xff] %vm2908, %v2593
    %2959 = vst.msk [vmem:[%s2 + $0x190] sm:$0xff] %vm2908, %v2598
    %2960 = vst.msk [vmem:[%s2 + $0x198] sm:$0xff] %vm2908, %v2601
    %2961 = vst.msk [vmem:[%s2 + $0x1a0] sm:$0xff] %vm2908, %v2606
    %2962 = vst.msk [vmem:[%s2 + $0x1a8] sm:$0xff] %vm2908, %v2609
    %2963 = vst.msk [vmem:[%s2 + $0x1b0] sm:$0xff] %vm2908, %v2614
    %2964 = vst.msk [vmem:[%s2 + $0x1b8] sm:$0xff] %vm2908, %v2617
    %2965 = vst.msk [vmem:[%s2 + $0x1c0] sm:$0xff] %vm2908, %v2622
    %2966 = vst.msk [vmem:[%s2 + $0x1c8] sm:$0xff] %vm2908, %v2625
    %2967 = vst.msk [vmem:[%s2 + $0x1d0] sm:$0xff] %vm2908, %v2630
    %2968 = vst.msk [vmem:[%s2 + $0x1d8] sm:$0xff] %vm2908, %v2633
    %2969 = vst.msk [vmem:[%s2 + $0x1e0] sm:$0xff] %vm2908, %v2638
    %2970 = vst.msk [vmem:[%s2 + $0x1e8] sm:$0xff] %vm2908, %v2641
    %2971 = vst.msk [vmem:[%s2 + $0x1f0] sm:$0xff] %vm2908, %v2646
    %2972 = vst.msk [vmem:[%s2 + $0x1f8] sm:$0xff] %vm2908, %v2649
    %2973 = vst.msk [vmem:[%s2 + $0x200] sm:$0xff] %vm2908, %v2654
    %2974 = vst.msk [vmem:[%s2 + $0x208] sm:$0xff] %vm2908, %v2657
    %2975 = vst.msk [vmem:[%s2 + $0x210] sm:$0xff] %vm2908, %v2662
    %2976 = vst.msk [vmem:[%s2 + $0x218] sm:$0xff] %vm2908, %v2665
    %2977 = vst.msk [vmem:[%s2 + $0x220] sm:$0xff] %vm2908, %v2670
    %2978 = vst.msk [vmem:[%s2 + $0x228] sm:$0xff] %vm2908, %v2673
    %2979 = vst.msk [vmem:[%s2 + $0x230] sm:$0xff] %vm2908, %v2678
    %2980 = vst.msk [vmem:[%s2 + $0x238] sm:$0xff] %vm2908, %v2681
    %2981 = vst.msk [vmem:[%s2 + $0x240] sm:$0xff] %vm2908, %v2686
    %2982 = vst.msk [vmem:[%s2 + $0x248] sm:$0xff] %vm2908, %v2689
    %2983 = vst.msk [vmem:[%s2 + $0x250] sm:$0xff] %vm2908, %v2694
    %2984 = vst.msk [vmem:[%s2 + $0x258] sm:$0xff] %vm2908, %v2697
    %2985 = vst.msk [vmem:[%s2 + $0x260] sm:$0xff] %vm2908, %v2702
    %2986 = vst.msk [vmem:[%s2 + $0x268] sm:$0xff] %vm2908, %v2705
    %2987 = vst.msk [vmem:[%s2 + $0x270] sm:$0xff] %vm2908, %v2710
    %2988 = vst.msk [vmem:[%s2 + $0x278] sm:$0xff] %vm2908, %v2713
    %2989 = vst.msk [vmem:[%s2 + $0x280] sm:$0xff] %vm2908, %v2718
    %2990 = vst.msk [vmem:[%s2 + $0x288] sm:$0xff] %vm2908, %v2721
    %2991 = vst.msk [vmem:[%s2 + $0x290] sm:$0xff] %vm2908, %v2726
    %2992 = vst.msk [vmem:[%s2 + $0x298] sm:$0xff] %vm2908, %v2729
    %2993 = vst.msk [vmem:[%s2 + $0x2a0] sm:$0xff] %vm2908, %v2734
    %2994 = vst.msk [vmem:[%s2 + $0x2a8] sm:$0xff] %vm2908, %v2737
    %2995 = vst.msk [vmem:[%s2 + $0x2b0] sm:$0xff] %vm2908, %v2742
    %2996 = vst.msk [vmem:[%s2 + $0x2b8] sm:$0xff] %vm2908, %v2745
    %2997 = vst.msk [vmem:[%s2 + $0x2c0] sm:$0xff] %vm2908, %v2750
    %2998 = vst.msk [vmem:[%s2 + $0x2c8] sm:$0xff] %vm2908, %v2753
    %2999 = vst.msk [vmem:[%s2 + $0x2d0] sm:$0xff] %vm2908, %v2758
    %3000 = vst.msk [vmem:[%s2 + $0x2d8] sm:$0xff] %vm2908, %v2761
    %3001 = vst.msk [vmem:[%s2 + $0x2e0] sm:$0xff] %vm2908, %v2766
    %3002 = vst.msk [vmem:[%s2 + $0x2e8] sm:$0xff] %vm2908, %v2769
    %3003 = vst.msk [vmem:[%s2 + $0x2f0] sm:$0xff] %vm2908, %v2774
    %3004 = vst.msk [vmem:[%s2 + $0x2f8] sm:$0xff] %vm2908, %v2777
    %3005 = vst.msk [vmem:[%s2 + $0x300] sm:$0xff] %vm2908, %v2782
    %3006 = vst.msk [vmem:[%s2 + $0x308] sm:$0xff] %vm2908, %v2785
    %3007 = vst.msk [vmem:[%s2 + $0x310] sm:$0xff] %vm2908, %v2790
    %3008 = vst.msk [vmem:[%s2 + $0x318] sm:$0xff] %vm2908, %v2793
    %3009 = vst.msk [vmem:[%s2 + $0x320] sm:$0xff] %vm2908, %v2798
    %3010 = vst.msk [vmem:[%s2 + $0x328] sm:$0xff] %vm2908, %v2801
    %3011 = vst.msk [vmem:[%s2 + $0x330] sm:$0xff] %vm2908, %v2806
    %3012 = vst.msk [vmem:[%s2 + $0x338] sm:$0xff] %vm2908, %v2809
    %3013 = vst.msk [vmem:[%s2 + $0x340] sm:$0xff] %vm2908, %v2814
    %3014 = vst.msk [vmem:[%s2 + $0x348] sm:$0xff] %vm2908, %v2817
    %3015 = vst.msk [vmem:[%s2 + $0x350] sm:$0xff] %vm2908, %v2822
    %3016 = vst.msk [vmem:[%s2 + $0x358] sm:$0xff] %vm2908, %v2825
    %3017 = vst.msk [vmem:[%s2 + $0x360] sm:$0xff] %vm2908, %v2830
    %3018 = vst.msk [vmem:[%s2 + $0x368] sm:$0xff] %vm2908, %v2833
    %3019 = vst.msk [vmem:[%s2 + $0x370] sm:$0xff] %vm2908, %v2838
    %3020 = vst.msk [vmem:[%s2 + $0x378] sm:$0xff] %vm2908, %v2841
    %3021 = vst.msk [vmem:[%s2 + $0x380] sm:$0xff] %vm2908, %v2846
    %3022 = vst.msk [vmem:[%s2 + $0x388] sm:$0xff] %vm2908, %v2849
    %3023 = vst.msk [vmem:[%s2 + $0x390] sm:$0xff] %vm2908, %v2854
    %3024 = vst.msk [vmem:[%s2 + $0x398] sm:$0xff] %vm2908, %v2857
    %3025 = vst.msk [vmem:[%s2 + $0x3a0] sm:$0xff] %vm2908, %v2862
    %3026 = vst.msk [vmem:[%s2 + $0x3a8] sm:$0xff] %vm2908, %v2865
    %3027 = vst.msk [vmem:[%s2 + $0x3b0] sm:$0xff] %vm2908, %v2870
    %3028 = vst.msk [vmem:[%s2 + $0x3b8] sm:$0xff] %vm2908, %v2873
    %3029 = vst.msk [vmem:[%s2 + $0x3c0] sm:$0xff] %vm2908, %v2878
    %3030 = vst.msk [vmem:[%s2 + $0x3c8] sm:$0xff] %vm2908, %v2881
    %3031 = vst.msk [vmem:[%s2 + $0x3d0] sm:$0xff] %vm2908, %v2886
    %3032 = vst.msk [vmem:[%s2 + $0x3d8] sm:$0xff] %vm2908, %v2889
    %3033 = vst.msk [vmem:[%s2 + $0x3e0] sm:$0xff] %vm2908, %v2894
    %3034 = vst.msk [vmem:[%s2 + $0x3e8] sm:$0xff] %vm2908, %v2897
    %3035 = vst.msk [vmem:[%s2 + $0x3f0] sm:$0xff] %vm2908, %v2902
    %3036 = vst.msk [vmem:[%s2 + $0x3f8] sm:$0xff] %vm2908, %v2905
    // Predicated region
    $region14: #{tpu_custom_call.1} parent=1 // pred_check
      _
    $region15: #{tpu_custom_call.1} parent=1 // pred_check_branch
      %3038 = sbr.rel (0) target = $region17
    $region16: #{tpu_custom_call.1} parent=1 // pred_region
      _
    $region17: #{tpu_custom_call.1} parent=1 // pred_fallthru
      _
    // Predicated region
    $region18: #{tpu_custom_call.1} parent=1 // pred_check
      _
    $region19: #{tpu_custom_call.1} parent=1 // pred_check_branch
      %3040 = sbr.rel (0) target = $region21
    $region20: #{tpu_custom_call.1} parent=1 // pred_region
      _
    $region21: #{tpu_custom_call.1} parent=1 // pred_fallthru
      _
    %3041 = vsyncpa [#allocation3], 1

</llo_original>
